<compile_context>
chip_gen: v7x
topology: tpu7x:2x2x1
jax: 0.10.0
libtpu: 0.0.40
codegen_flags: <defaults>
</compile_context>

<pallas_src>
import jax
import jax.numpy as jnp
from jax.experimental import pallas as pl
from jax.experimental.pallas import tpu as pltpu


# ----------------------------------------------------------------------------
# Shared per-branch math.
#   h        = tanh(x_bf16 @ W1x_bf16 + b1_eff)          (bp, 256)  f32
#   [mu|lv]  = h_bf16 @ Whd_bf16 + bhd                    (bp, 512)  f32
#   z        = mu + exp(0.5*lv) * eps                     (bp, 256)  f32
#   returns  [z | mu | lv]                                (bp, 768)  f32
# ----------------------------------------------------------------------------
def _branch_compute(x_bf16, w1x, b1e, whd, bhd, eps):
    h = jnp.tanh(
        jnp.dot(x_bf16, w1x, preferred_element_type=jnp.float32) + b1e)
    mulv = (jnp.dot(h.astype(jnp.bfloat16), whd,
                    preferred_element_type=jnp.float32) + bhd)
    zdim = eps.shape[-1]
    z = mulv[:, :zdim] + jnp.exp(0.5 * mulv[:, zdim:]) * eps
    return jnp.concatenate([z, mulv], axis=-1)


# Kernel A: one grid step per branch (multi-TensorCore chips, e.g. v7x).
def _cvae_branch_kernel(x_ref, w1x_ref, b1e_ref, whd_ref, bhd_ref, eps_ref,
                        out_ref):
    out_ref[...] = _branch_compute(x_ref[...], w1x_ref[...], b1e_ref[...],
                                   whd_ref[...], bhd_ref[...], eps_ref[...])


# Kernel B: single grid step, both branches unrolled (single-TC v5e/v6e).
def _cvae_single_kernel(x_ref, w1x_ref, b1e_ref, whd_ref, bhd_ref, eps_ref,
                        out_ref):
    x = x_ref[...]                       # load x once, shared by both branches
    for b in range(2):                   # static unroll
        out_ref[b] = _branch_compute(x, w1x_ref[b], b1e_ref[b],
                                     whd_ref[b], bhd_ref[b], eps_ref[b])


def _single_tensorcore_chip():
    """True only for known 1-TensorCore parts (v5e / v6e)."""
    try:
        kind = jax.devices()[0].device_kind.lower()
    except Exception:
        return False
    return any(t in kind for t in ("v5 lite", "v5e", "v5litepod",
                                   "v6 lite", "v6e"))


def cvae_fused_call(x_p, w1x, b1e, whd, bhd, eps_st):
    """Fused CVAE forward for both branches in one pallas_call."""
    bp, x_dim = x_p.shape
    hidden = w1x.shape[-1]
    z2 = whd.shape[-1]
    z = z2 // 2

    flops = 2 * 2 * bp * (x_dim * hidden + hidden * z2)
    transcendentals = 2 * bp * (hidden + z)            # tanh + exp
    bytes_accessed = (x_p.size * 2 + w1x.size * 2 + whd.size * 2
                      + b1e.size * 4 + bhd.size * 4 + eps_st.size * 4
                      + 2 * bp * (z + z2) * 4)
    cost = pl.CostEstimate(flops=int(flops),
                           transcendentals=int(transcendentals),
                           bytes_accessed=int(bytes_accessed))
    out_shape = jax.ShapeDtypeStruct((2, bp, z + z2), jnp.float32)

    if _single_tensorcore_chip():
        # One step, one (larger) weight DMA, no per-step pipeline overhead.
        return pl.pallas_call(
            _cvae_single_kernel,
            out_shape=out_shape,
            grid=(1,),
            in_specs=[
                pl.BlockSpec((bp, x_dim), lambda i: (0, 0)),
                pl.BlockSpec((2, x_dim, hidden), lambda i: (0, 0, 0)),
                pl.BlockSpec((2, bp, hidden), lambda i: (0, 0, 0)),
                pl.BlockSpec((2, hidden, z2), lambda i: (0, 0, 0)),
                pl.BlockSpec((2, 1, z2), lambda i: (0, 0, 0)),
                pl.BlockSpec((2, bp, z), lambda i: (0, 0, 0)),
            ],
            out_specs=pl.BlockSpec((2, bp, z + z2), lambda i: (0, 0, 0)),
            compiler_params=pltpu.CompilerParams(
                dimension_semantics=("arbitrary",)),
            cost_estimate=cost,
        )(x_p, w1x, b1e, whd, bhd, eps_st)

    # Multi-TC parts: branch axis as a "parallel" grid axis (one branch/core).
    return pl.pallas_call(
        _cvae_branch_kernel,
        out_shape=out_shape,
        grid=(2,),
        in_specs=[
            pl.BlockSpec((bp, x_dim), lambda b: (0, 0)),          # x shared
            pl.BlockSpec((None, x_dim, hidden), lambda b: (b, 0, 0)),
            pl.BlockSpec((None, bp, hidden), lambda b: (b, 0, 0)),
            pl.BlockSpec((None, hidden, z2), lambda b: (b, 0, 0)),
            pl.BlockSpec((None, 1, z2), lambda b: (b, 0, 0)),
            pl.BlockSpec((None, bp, z), lambda b: (b, 0, 0)),
        ],
        out_specs=pl.BlockSpec((None, bp, z + z2), lambda b: (b, 0, 0)),
        compiler_params=pltpu.CompilerParams(
            dimension_semantics=("parallel",)),
        cost_estimate=cost,
    )(x_p, w1x, b1e, whd, bhd, eps_st)


# ----------------------------------------------------------------------------
# Parameter init (mirrors torch: xavier_normal_ weights, zero biases,
# N(0,1) embeddings).  Matmul weights stored bf16, biases / tables f32.
# ----------------------------------------------------------------------------
def xavier_normal(key, fan_in, fan_out):
    std = (2.0 / (fan_in + fan_out)) ** 0.5
    return std * jax.random.normal(key, (fan_in, fan_out), dtype=jnp.float32)


def init_params(key, x_dim, y_dim=10, z_dim=256, hidden=256,
                n_classes_acc=6, n_classes_spk=24):
    ks = jax.random.split(key, 8)

    W1_a = xavier_normal(ks[0], x_dim + y_dim, hidden)
    Wmu_a = xavier_normal(ks[1], hidden, z_dim)
    Wlv_a = xavier_normal(ks[2], hidden, z_dim)
    W1_s = xavier_normal(ks[3], x_dim + y_dim, hidden)
    Wmu_s = xavier_normal(ks[4], hidden, z_dim)
    Wlv_s = xavier_normal(ks[5], hidden, z_dim)

    emb_acc = jax.random.normal(ks[6], (n_classes_acc, y_dim), jnp.float32)
    emb_spk = jax.random.normal(ks[7], (n_classes_spk, y_dim), jnp.float32)
    b1 = jnp.zeros((hidden,), jnp.float32)          # torch init: zero bias

    return {
        "emb_acc": emb_acc,
        "emb_spk": emb_spk,
        # K=10 label matmul folded into a per-class effective bias (f32):
        "b1e_acc": emb_acc @ W1_a[x_dim:] + b1,     # (n_classes_acc, hidden)
        "b1e_spk": emb_spk @ W1_s[x_dim:] + b1,     # (n_classes_spk, hidden)
        # x-part of linear_1, stacked over branches, bf16:
        "W1x": jnp.stack([W1_a[:x_dim], W1_s[:x_dim]]).astype(jnp.bfloat16),
        # Fused mu/logvar head: (2, hidden, 2*z_dim), bf16:
        "Whd": jnp.stack([
            jnp.concatenate([Wmu_a, Wlv_a], axis=1),
            jnp.concatenate([Wmu_s, Wlv_s], axis=1),
        ]).astype(jnp.bfloat16),
        "bhd": jnp.zeros((2, 1, 2 * z_dim), jnp.float32),
    }


# ----------------------------------------------------------------------------
# Full CVAEnet.forward (training=True reparameterization).
# ----------------------------------------------------------------------------
@jax.jit
def cvae_forward(x, label_acc, label_spk, params, eps_acc, eps_spk):
    B = x.shape[0]
    x_flat = x.reshape(B, -1)                          # x.view(B, -1)
    z_dim = eps_acc.shape[-1]

    # Pad batch to a multiple of 16 (bf16 sublane packing); cast x to bf16.
    bp = max(16, ((B + 15) // 16) * 16)
    pad = bp - B
    x_p = jnp.pad(x_flat, ((0, pad), (0, 0))).astype(jnp.bfloat16)

    # Embedding lookups (tiny gathers; stay in XLA) -- y_acc/y_spk returned.
    y_acc = params["emb_acc"][label_acc]
    y_spk = params["emb_spk"][label_spk]

    # Per-sample effective bias (replaces the in-kernel y @ W1y matmul).
    b1e = jnp.stack([
        jnp.pad(params["b1e_acc"][label_acc], ((0, pad), (0, 0))),
        jnp.pad(params["b1e_spk"][label_spk], ((0, pad), (0, 0))),
    ])                                                 # (2, bp, hidden)
    eps_st = jnp.stack([jnp.pad(eps_acc, ((0, pad), (0, 0))),
                        jnp.pad(eps_spk, ((0, pad), (0, 0)))])

    out = cvae_fused_call(x_p, params["W1x"], b1e, params["Whd"],
                          params["bhd"], eps_st)       # (2, bp, 3*z_dim)

    z_acc = out[0, :B, :z_dim]
    z_spk = out[1, :B, :z_dim]
    mu_acc = out[0, :B, z_dim:2 * z_dim]
    lv_acc = out[0, :B, 2 * z_dim:]
    mu_spk = out[1, :B, z_dim:2 * z_dim]
    lv_spk = out[1, :B, 2 * z_dim:]

    return (z_acc, y_acc, z_spk, y_spk, (mu_acc, lv_acc, mu_spk, lv_spk))


# Pure-JAX f32 reference (same restructured params, upcast), for validation.
def cvae_reference(x, label_acc, label_spk, params, eps_acc, eps_spk):
    B = x.shape[0]
    x_flat = x.reshape(B, -1).astype(jnp.float32)
    z_dim = eps_acc.shape[-1]
    w1x = params["W1x"].astype(jnp.float32)
    whd = params["Whd"].astype(jnp.float32)
    outs = []
    for b, (tbl, labels, eps) in enumerate(
            [(params["b1e_acc"], label_acc, eps_acc),
             (params["b1e_spk"], label_spk, eps_spk)]):
        h = jnp.tanh(x_flat @ w1x[b] + tbl[labels])
        mulv = h @ whd[b] + params["bhd"][b]
        mu, lv = mulv[:, :z_dim], mulv[:, z_dim:]
        outs.append((mu + jnp.exp(0.5 * lv) * eps, mu, lv))
    return outs


if __name__ == "__main__":
    key = jax.random.PRNGKey(0)
    k_x, k_p, k_ea, k_es, k_la, k_ls = jax.random.split(key, 6)

    # Module-consistent small shapes: x is NCHW (2, 4, 16, 16) -> x_dim = 1024.
    B, C, H, W = 2, 4, 16, 16
    x_dim = C * H * W
    z_dim = 256
    y_dim = 10

    x = jax.random.normal(k_x, (B, C, H, W), dtype=jnp.float32)
    label_acc = jax.random.randint(k_la, (B,), 0, 6)
    label_spk = jax.random.randint(k_ls, (B,), 0, 24)

    params = init_params(k_p, x_dim, y_dim=y_dim, z_dim=z_dim,
                         n_classes_acc=6, n_classes_spk=24)

    # reparameterize(training=True): eps ~ N(0,1), sampled deterministically.
    eps_acc = jax.random.normal(k_ea, (B, z_dim), dtype=jnp.float32)
    eps_spk = jax.random.normal(k_es, (B, z_dim), dtype=jnp.float32)

    out = cvae_forward(x, label_acc, label_spk, params, eps_acc, eps_spk)
    jax.block_until_ready(out)

    z_acc, y_acc, z_spk, y_spk, (mu_a, lv_a, mu_s, lv_s) = out
    assert z_acc.shape == (B, z_dim) and z_spk.shape == (B, z_dim)
    assert y_acc.shape == (B, y_dim) and y_spk.shape == (B, y_dim)
    assert mu_a.shape == lv_a.shape == mu_s.shape == lv_s.shape == (B, z_dim)
    assert jnp.all(jnp.isfinite(z_acc)) and jnp.all(jnp.isfinite(z_spk))

    # Validate against an f32 reference (bf16 activations/weights => ~1e-2 tol).
    (rz_a, rmu_a, rlv_a), (rz_s, rmu_s, rlv_s) = cvae_reference(
        x, label_acc, label_spk, params, eps_acc, eps_spk)
    tol = dict(rtol=5e-2, atol=5e-2)
    assert jnp.allclose(mu_a, rmu_a, **tol) and jnp.allclose(lv_a, rlv_a, **tol)
    assert jnp.allclose(mu_s, rmu_s, **tol) and jnp.allclose(lv_s, rlv_s, **tol)
    assert jnp.allclose(z_acc, rz_a, **tol) and jnp.allclose(z_spk, rz_s, **tol)

    print("KERNEL_OK")
</pallas_src>

<mosaic_0001>
module attributes {stable_mosaic.version = 11 : i64} {
  func.func @_cvae_branch_kernel(%arg0: i32, %arg1: memref<16x1024xbf16, #tpu.memory_space<vmem>>, %arg2: memref<1x1024x256xbf16, #tpu.memory_space<vmem>>, %arg3: memref<1x16x256xf32, #tpu.memory_space<vmem>>, %arg4: memref<1x256x512xbf16, #tpu.memory_space<vmem>>, %arg5: memref<1x1x512xf32, #tpu.memory_space<vmem>>, %arg6: memref<1x16x256xf32, #tpu.memory_space<vmem>>, %arg7: memref<1x16x768xf32, #tpu.memory_space<vmem>>) attributes {dimension_semantics = [#tpu.dimension_semantics<parallel>], iteration_bounds = array<i64: 2>, scalar_prefetch = 0 : i64, scratch_operands = 0 : i64, tpu.core_type = #tpu.core_type<tc>, window_params = [{pipeline_mode = #tpu.pipeline_mode<synchronous>, transform_indices = @transform_0, window_bounds = array<i64: 16, 1024>}, {transform_indices = @transform_1, window_bounds = array<i64: 1, 1024, 256>}, {transform_indices = @transform_2, window_bounds = array<i64: 1, 16, 256>}, {transform_indices = @transform_3, window_bounds = array<i64: 1, 256, 512>}, {transform_indices = @transform_4, window_bounds = array<i64: 1, 1, 512>}, {transform_indices = @transform_5, window_bounds = array<i64: 1, 16, 256>}, {transform_indices = @transform_6, window_bounds = array<i64: 1, 16, 768>}]} {
    %c0 = arith.constant 0 : index
    %c0_0 = arith.constant 0 : index
    %0 = vector.load %arg1[%c0, %c0_0] : memref<16x1024xbf16, #tpu.memory_space<vmem>>, vector<16x1024xbf16>
    %c0_1 = arith.constant 0 : index
    %c0_2 = arith.constant 0 : index
    %c0_3 = arith.constant 0 : index
    %1 = vector.load %arg2[%c0_1, %c0_2, %c0_3] : memref<1x1024x256xbf16, #tpu.memory_space<vmem>>, vector<1x1024x256xbf16>
    %2 = vector.shape_cast %1 : vector<1x1024x256xbf16> to vector<1024x256xbf16>
    %c0_4 = arith.constant 0 : index
    %c0_5 = arith.constant 0 : index
    %c0_6 = arith.constant 0 : index
    %3 = vector.load %arg3[%c0_4, %c0_5, %c0_6] : memref<1x16x256xf32, #tpu.memory_space<vmem>>, vector<1x16x256xf32>
    %4 = vector.shape_cast %3 : vector<1x16x256xf32> to vector<16x256xf32>
    %c0_7 = arith.constant 0 : index
    %c0_8 = arith.constant 0 : index
    %c0_9 = arith.constant 0 : index
    %5 = vector.load %arg4[%c0_7, %c0_8, %c0_9] : memref<1x256x512xbf16, #tpu.memory_space<vmem>>, vector<1x256x512xbf16>
    %6 = vector.shape_cast %5 : vector<1x256x512xbf16> to vector<256x512xbf16>
    %c0_10 = arith.constant 0 : index
    %c0_11 = arith.constant 0 : index
    %c0_12 = arith.constant 0 : index
    %7 = vector.load %arg5[%c0_10, %c0_11, %c0_12] : memref<1x1x512xf32, #tpu.memory_space<vmem>>, vector<1x1x512xf32>
    %8 = vector.shape_cast %7 : vector<1x1x512xf32> to vector<1x512xf32>
    %c0_13 = arith.constant 0 : index
    %c0_14 = arith.constant 0 : index
    %c0_15 = arith.constant 0 : index
    %9 = vector.load %arg6[%c0_13, %c0_14, %c0_15] : memref<1x16x256xf32, #tpu.memory_space<vmem>>, vector<1x16x256xf32>
    %10 = vector.shape_cast %9 : vector<1x16x256xf32> to vector<16x256xf32>
    %cst = arith.constant dense<0.000000e+00> : vector<16x256xf32>
    %11 = tpu.matmul %0, %2, %cst {dimension_numbers = #tpu.dot_dimension_numbers<[1], [0], [0], [1], [0, 0, 1, 1], [], []>} : vector<16x1024xbf16>, vector<1024x256xbf16>, vector<16x256xf32> -> vector<16x256xf32>
    %12 = arith.addf %11, %4 : vector<16x256xf32>
    %13 = math.tanh %12 : vector<16x256xf32>
    %14 = arith.truncf %13 : vector<16x256xf32> to vector<16x256xbf16>
    %cst_16 = arith.constant dense<0.000000e+00> : vector<16x512xf32>
    %15 = tpu.matmul %14, %6, %cst_16 {dimension_numbers = #tpu.dot_dimension_numbers<[1], [0], [0], [1], [0, 0, 1, 1], [], []>} : vector<16x256xbf16>, vector<256x512xbf16>, vector<16x512xf32> -> vector<16x512xf32>
    %16 = vector.broadcast %8 : vector<1x512xf32> to vector<16x512xf32>
    %17 = arith.addf %15, %16 : vector<16x512xf32>
    %18 = vector.extract_strided_slice %17 {offsets = [0, 0], sizes = [16, 256], strides = [1, 1]} : vector<16x512xf32> to vector<16x256xf32>
    %19 = vector.extract_strided_slice %17 {offsets = [0, 256], sizes = [16, 256], strides = [1, 1]} : vector<16x512xf32> to vector<16x256xf32>
    %cst_17 = arith.constant 5.000000e-01 : f32
    %20 = vector.broadcast %cst_17 : f32 to vector<16x256xf32>
    %21 = arith.mulf %20, %19 : vector<16x256xf32>
    %22 = math.exp %21 : vector<16x256xf32>
    %23 = arith.mulf %22, %10 : vector<16x256xf32>
    %24 = arith.addf %18, %23 : vector<16x256xf32>
    %25 = tpu.concatenate %24, %17 in 1 : vector<16x256xf32>, vector<16x512xf32> -> vector<16x768xf32>
    %c0_18 = arith.constant 0 : index
    %c0_19 = arith.constant 0 : index
    %c0_20 = arith.constant 0 : index
    %26 = vector.load %arg7[%c0_18, %c0_19, %c0_20] : memref<1x16x768xf32, #tpu.memory_space<vmem>>, vector<1x16x768xf32>
    %27 = vector.shape_cast %26 : vector<1x16x768xf32> to vector<16x768xf32>
    %28 = vector.shape_cast %25 : vector<16x768xf32> to vector<1x16x768xf32>
    tpu.vector_store %arg7[%c0_18, %c0_19, %c0_20], %28 {strides = array<i32>} : memref<1x16x768xf32, #tpu.memory_space<vmem>>, vector<1x16x768xf32>,
    return
  }
  func.func @transform_0(%arg0: i32) -> (i32, i32) {
    %c0_i32 = arith.constant 0 : i32
    %c0_i32_0 = arith.constant 0 : i32
    %c0_i32_1 = arith.constant 0 : i32
    return %c0_i32, %c0_i32_0 : i32, i32
  }
  func.func @transform_1(%arg0: i32) -> (i32, i32, i32) {
    %c0_i32 = arith.constant 0 : i32
    %c0_i32_0 = arith.constant 0 : i32
    %c0_i32_1 = arith.constant 0 : i32
    return %arg0, %c0_i32, %c0_i32_0 : i32, i32, i32
  }
  func.func @transform_2(%arg0: i32) -> (i32, i32, i32) {
    %c0_i32 = arith.constant 0 : i32
    %c0_i32_0 = arith.constant 0 : i32
    %c0_i32_1 = arith.constant 0 : i32
    return %arg0, %c0_i32, %c0_i32_0 : i32, i32, i32
  }
  func.func @transform_3(%arg0: i32) -> (i32, i32, i32) {
    %c0_i32 = arith.constant 0 : i32
    %c0_i32_0 = arith.constant 0 : i32
    %c0_i32_1 = arith.constant 0 : i32
    return %arg0, %c0_i32, %c0_i32_0 : i32, i32, i32
  }
  func.func @transform_4(%arg0: i32) -> (i32, i32, i32) {
    %c0_i32 = arith.constant 0 : i32
    %c0_i32_0 = arith.constant 0 : i32
    %c0_i32_1 = arith.constant 0 : i32
    return %arg0, %c0_i32, %c0_i32_0 : i32, i32, i32
  }
  func.func @transform_5(%arg0: i32) -> (i32, i32, i32) {
    %c0_i32 = arith.constant 0 : i32
    %c0_i32_0 = arith.constant 0 : i32
    %c0_i32_1 = arith.constant 0 : i32
    return %arg0, %c0_i32, %c0_i32_0 : i32, i32, i32
  }
  func.func @transform_6(%arg0: i32) -> (i32, i32, i32) {
    %c0_i32 = arith.constant 0 : i32
    %c0_i32_0 = arith.constant 0 : i32
    %c0_i32_1 = arith.constant 0 : i32
    return %arg0, %c0_i32, %c0_i32_0 : i32, i32, i32
  }
}

</mosaic_0001>

<llo_original>
// kernel: cvae_forward.1
$region0: #{cvae_forward.1}
  #allocation0 [shape = 'u32[]', space=smem, size = 0x4, offset = 0x4, fixed_abs, tag = 'smem constant byte address 0x4 - core index']
  #allocation1 [shape = 'u32[144,128]{1,0:T(1,128)}', space=vmem, size = 0x12000, scoped, tag = 'internal scratch']
  %s0 = inlined_call_operand.vmem [shape: bf16[16,1024], index: 0, kind: input, shape index: {}]
  %s1 = inlined_call_operand.hbm [shape: bf16[2,1024,256], index: 1, kind: input, shape index: {}]
  %s2 = inlined_call_operand.vmem [shape: f32[2,16,256], index: 2, kind: input, shape index: {}]
  %s3 = inlined_call_operand.hbm [shape: bf16[2,256,512], index: 3, kind: input, shape index: {}]
  %s4 = inlined_call_operand.vmem [shape: f32[2,1,512], index: 4, kind: input, shape index: {}]
  %s5 = inlined_call_operand.vmem [shape: f32[2,16,256], index: 5, kind: input, shape index: {}]
  %s6 = inlined_call_operand.vmem [shape: f32[2,16,768], index: 6, kind: output, shape index: {}]
  %s7 = sld [smem:[#allocation0]]
  $region65: #{cvae_forward.1} parent=0
    _
  %s9 = ssub.s32 1, %s7
  %s10 = scalar_select 0, %s9, %s7
  $region1: #{cvae_forward.1} parent=0
    #allocation2 [shape = 'u8[1048576]{0}', space=vmem, size = 0x100000, scoped, tag = 'input window, operand 1']
    #allocation3 [shape = 's32[2]{0}', space=sflag, size = 0x8, scoped, tag = 'scoped memory for cvae_forward.1']
    #allocation4 [shape = 'u8[524288]{0}', space=vmem, size = 0x80000, scoped, tag = 'input window, operand 3']
    #allocation5 [shape = 's32[2]{0}', space=sflag, size = 0x8, scoped, tag = 'scoped memory for cvae_forward.1']
    %11 = vsyncpa [#allocation3], 0
    %s12 = scalar_lea.sflag [#allocation3], 1
    %13 = vsyncpa %s12, 0
    %14 = vsyncpa [#allocation5], 0
    %s15 = scalar_lea.sflag [#allocation5], 1
    %16 = vsyncpa %s15, 0
    loop: start=0, step=1, limit=4
    $region2: #{cvae_forward.1} parent=1 // loop_pre_header
      _
    $region3: #{cvae_forward.1} parent=1 // loop_header
      %s18 = sphi 0, %s22
      %p19 = scmp.ge.s32.totalorder %s18, 4
      %s26 = sphi 0, %s26
      %s28 = sphi 0, %s26
      %s29 = sphi 0, %s28
      %s43 = sphi 0, %s29
      %s49 = sphi 0, %s51
      %s52 = sphi 0, %s49
      %s53 = sphi 0, %s52
      %s69 = sphi 0, %s53
      %s75 = sphi 0, %s77
      %s78 = sphi 0, %s75
      %s79 = sphi 0, %s78
      %s95 = sphi 0, %s79
      %s101 = sphi 0, %s103
      %s104 = sphi 0, %s101
      %s105 = sphi 0, %s104
      %s121 = sphi 0, %s105
      %s127 = sphi 0, %s129
      %s130 = sphi 0, %s127
      %s131 = sphi 0, %s130
      %s147 = sphi 0, %s131
      %s153 = sphi 0, %s155
      %s156 = sphi 0, %s153
      %s157 = sphi 0, %s156
      %s173 = sphi 0, %s157
      %s179 = sphi 0, %s181
      %s182 = sphi 0, %s179
      %s183 = sphi 0, %s182
      %s199 = sphi 0, %s183
    $region4: #{cvae_forward.1} parent=1 // loop_header_branch
      %21 = sbr.rel (%p19) target = $region8
    $region5: #{cvae_forward.1} parent=1 // loop_body
      %s23 = ssub.s32 %s18, 1
      %s24 = ssub.s32 %s18, 2
      %s25 = sadd.s32 %s18, 1
      %s27 = sadd.s32 %s26, 1
      %p30 = scmp.eq.s32.totalorder %s18, 1
      %p31 = scmp.ne.s32.totalorder %s26, %s28
      %p32 = scmp.eq.s32.totalorder %s18, 0
      %p33 = por %p31, %p32
      %p34 = scmp.ne.s32.totalorder %s26, %s28
      %p35 = scmp.eq.s32.totalorder %s23, 1
      %p36 = por %p34, %p35
      %p37 = scmp.ne.s32.totalorder %s28, %s29
      %p38 = scmp.eq.s32.totalorder %s23, 0
      %p39 = por %p37, %p38
      %p40 = scmp.ne.s32.totalorder %s28, %s29
      %p41 = scmp.eq.s32.totalorder %s24, 1
      %p42 = por %p40, %p41
      %p44 = scmp.ne.s32.totalorder %s29, %s43
      %p45 = scmp.eq.s32.totalorder %s24, 0
      %p46 = por %p44, %p45
      %s47 = ssub.s32 %s18, %s25
      %p48 = scmp.eq.s32.totalorder %s47, 0
      %s50 = sadd.s32 %s49, 1
      %s51 = scalar_select %p48, %s49, %s50
      %p54 = pneg %p48
      %p55 = scmp.eq.s32.totalorder %s18, 1
      %p56 = por %p54, %p55
      %p57 = scmp.ne.s32.totalorder %s49, %s52
      %p58 = scmp.eq.s32.totalorder %s18, 0
      %p59 = por %p57, %p58
      %p60 = scmp.ne.s32.totalorder %s49, %s52
      %p61 = scmp.eq.s32.totalorder %s23, 1
      %p62 = por %p60, %p61
      %p63 = scmp.ne.s32.totalorder %s52, %s53
      %p64 = scmp.eq.s32.totalorder %s23, 0
      %p65 = por %p63, %p64
      %p66 = scmp.ne.s32.totalorder %s52, %s53
      %p67 = scmp.eq.s32.totalorder %s24, 1
      %p68 = por %p66, %p67
      %p70 = scmp.ne.s32.totalorder %s53, %s69
      %p71 = scmp.eq.s32.totalorder %s24, 0
      %p72 = por %p70, %p71
      %s73 = ssub.s32 %s18, %s25
      %p74 = scmp.eq.s32.totalorder %s73, 0
      %s76 = sadd.s32 %s75, 1
      %s77 = scalar_select %p74, %s75, %s76
      %p80 = pneg %p74
      %p81 = scmp.eq.s32.totalorder %s18, 1
      %p82 = por %p80, %p81
      %p83 = scmp.ne.s32.totalorder %s75, %s78
      %p84 = scmp.eq.s32.totalorder %s18, 0
      %p85 = por %p83, %p84
      %p86 = scmp.ne.s32.totalorder %s75, %s78
      %p87 = scmp.eq.s32.totalorder %s23, 1
      %p88 = por %p86, %p87
      %p89 = scmp.ne.s32.totalorder %s78, %s79
      %p90 = scmp.eq.s32.totalorder %s23, 0
      %p91 = por %p89, %p90
      %p92 = scmp.ne.s32.totalorder %s78, %s79
      %p93 = scmp.eq.s32.totalorder %s24, 1
      %p94 = por %p92, %p93
      %p96 = scmp.ne.s32.totalorder %s79, %s95
      %p97 = scmp.eq.s32.totalorder %s24, 0
      %p98 = por %p96, %p97
      %s99 = ssub.s32 %s18, %s25
      %p100 = scmp.eq.s32.totalorder %s99, 0
      %s102 = sadd.s32 %s101, 1
      %s103 = scalar_select %p100, %s101, %s102
      %p106 = pneg %p100
      %p107 = scmp.eq.s32.totalorder %s18, 1
      %p108 = por %p106, %p107
      %p109 = scmp.ne.s32.totalorder %s101, %s104
      %p110 = scmp.eq.s32.totalorder %s18, 0
      %p111 = por %p109, %p110
      %p112 = scmp.ne.s32.totalorder %s101, %s104
      %p113 = scmp.eq.s32.totalorder %s23, 1
      %p114 = por %p112, %p113
      %p115 = scmp.ne.s32.totalorder %s104, %s105
      %p116 = scmp.eq.s32.totalorder %s23, 0
      %p117 = por %p115, %p116
      %p118 = scmp.ne.s32.totalorder %s104, %s105
      %p119 = scmp.eq.s32.totalorder %s24, 1
      %p120 = por %p118, %p119
      %p122 = scmp.ne.s32.totalorder %s105, %s121
      %p123 = scmp.eq.s32.totalorder %s24, 0
      %p124 = por %p122, %p123
      %s125 = ssub.s32 %s18, %s25
      %p126 = scmp.eq.s32.totalorder %s125, 0
      %s128 = sadd.s32 %s127, 1
      %s129 = scalar_select %p126, %s127, %s128
      %p132 = pneg %p126
      %p133 = scmp.eq.s32.totalorder %s18, 1
      %p134 = por %p132, %p133
      %p135 = scmp.ne.s32.totalorder %s127, %s130
      %p136 = scmp.eq.s32.totalorder %s18, 0
      %p137 = por %p135, %p136
      %p138 = scmp.ne.s32.totalorder %s127, %s130
      %p139 = scmp.eq.s32.totalorder %s23, 1
      %p140 = por %p138, %p139
      %p141 = scmp.ne.s32.totalorder %s130, %s131
      %p142 = scmp.eq.s32.totalorder %s23, 0
      %p143 = por %p141, %p142
      %p144 = scmp.ne.s32.totalorder %s130, %s131
      %p145 = scmp.eq.s32.totalorder %s24, 1
      %p146 = por %p144, %p145
      %p148 = scmp.ne.s32.totalorder %s131, %s147
      %p149 = scmp.eq.s32.totalorder %s24, 0
      %p150 = por %p148, %p149
      %s151 = ssub.s32 %s18, %s25
      %p152 = scmp.eq.s32.totalorder %s151, 0
      %s154 = sadd.s32 %s153, 1
      %s155 = scalar_select %p152, %s153, %s154
      %p158 = pneg %p152
      %p159 = scmp.eq.s32.totalorder %s18, 1
      %p160 = por %p158, %p159
      %p161 = scmp.ne.s32.totalorder %s153, %s156
      %p162 = scmp.eq.s32.totalorder %s18, 0
      %p163 = por %p161, %p162
      %p164 = scmp.ne.s32.totalorder %s153, %s156
      %p165 = scmp.eq.s32.totalorder %s23, 1
      %p166 = por %p164, %p165
      %p167 = scmp.ne.s32.totalorder %s156, %s157
      %p168 = scmp.eq.s32.totalorder %s23, 0
      %p169 = por %p167, %p168
      %p170 = scmp.ne.s32.totalorder %s156, %s157
      %p171 = scmp.eq.s32.totalorder %s24, 1
      %p172 = por %p170, %p171
      %p174 = scmp.ne.s32.totalorder %s157, %s173
      %p175 = scmp.eq.s32.totalorder %s24, 0
      %p176 = por %p174, %p175
      %s177 = ssub.s32 %s18, %s25
      %p178 = scmp.eq.s32.totalorder %s177, 0
      %s180 = sadd.s32 %s179, 1
      %s181 = scalar_select %p178, %s179, %s180
      %p184 = pneg %p178
      %p185 = scmp.eq.s32.totalorder %s18, 1
      %p186 = por %p184, %p185
      %p187 = scmp.ne.s32.totalorder %s179, %s182
      %p188 = scmp.eq.s32.totalorder %s18, 0
      %p189 = por %p187, %p188
      %p190 = scmp.ne.s32.totalorder %s179, %s182
      %p191 = scmp.eq.s32.totalorder %s23, 1
      %p192 = por %p190, %p191
      %p193 = scmp.ne.s32.totalorder %s182, %s183
      %p194 = scmp.eq.s32.totalorder %s23, 0
      %p195 = por %p193, %p194
      %p196 = scmp.ne.s32.totalorder %s182, %s183
      %p197 = scmp.eq.s32.totalorder %s24, 1
      %p198 = por %p196, %p197
      %p200 = scmp.ne.s32.totalorder %s183, %s199
      %p201 = scmp.eq.s32.totalorder %s24, 0
      %p202 = por %p200, %p201
      %p203 = scmp.le.s32.totalorder 1, %s18
      %p204 = scmp.lt.s32.totalorder %s18, 3
      %p205 = pnand %p203, %p204
      %p206 = pneg %p205
      // Predicated region
      $region9: #{cvae_forward.1} parent=5 // pred_check
        _
      $region10: #{cvae_forward.1} parent=5 // pred_check_branch
        %208 = sbr.rel (%p205) target = $region12
      $region11: #{cvae_forward.1} parent=5 // pred_region
        %s209 = ssub.s32 %s18, 1
        // Predicated region
        $region13: #{cvae_forward.1} parent=11 // pred_check
          %p210 = pneg %p39
        $region14: #{cvae_forward.1} parent=11 // pred_check_branch
          %212 = sbr.rel (%p210) target = $region16
        $region15: #{cvae_forward.1} parent=11 // pred_region
          _
        $region16: #{cvae_forward.1} parent=11 // pred_fallthru
          _
      $region12: #{cvae_forward.1} parent=5 // pred_fallthru
        _
      %p213 = scmp.lt.s32.totalorder %s18, 2
      // Predicated region
      $region17: #{cvae_forward.1} parent=5 // pred_check
        %p214 = pneg %p213
      $region18: #{cvae_forward.1} parent=5 // pred_check_branch
        %216 = sbr.rel (%p214) target = $region20
      $region19: #{cvae_forward.1} parent=5 // pred_region
        // Predicated region
        $region21: #{cvae_forward.1} parent=19 // pred_check
          %p217 = pneg %p59
        $region22: #{cvae_forward.1} parent=19 // pred_check_branch
          %219 = sbr.rel (%p217) target = $region24
        $region23: #{cvae_forward.1} parent=19 // pred_region
          %s220 = sand.u32 %s49, 1
          %s221 = scalar_lea.sflag [#allocation3], %s220
          %s222 = sand.u32 %s49, 1
          %s223 = smul.addr %s222, 1024
          %s224 = scalar_lea.vmem [#allocation2], %s223
          %s226 = ssub.s32 16384, 16384
          %227 = vsyncadd %s221, %s226
          %s228 = smul.addr %s18, 256
          %s229 = smul.addr %s228, 64
          %s230 = scalar_lea.hbm %s1, %s229
          %s231 = sshll.u32 %s224, 4
          %s232 = int_to_ptr.vmem [resolvable:$true] %s231
          %237 = dma.hbm_to_vmem [thread:$0]  %s230, 16384, %s232, %s221, 128, 128, 8
        $region24: #{cvae_forward.1} parent=19 // pred_fallthru
          _
        // Predicated region
        $region25: #{cvae_forward.1} parent=19 // pred_check
          %p238 = pneg %p85
        $region26: #{cvae_forward.1} parent=19 // pred_check_branch
          %240 = sbr.rel (%p238) target = $region28
        $region27: #{cvae_forward.1} parent=19 // pred_region
          %p241 = scmp.lt.s32.totalorder %s18, 1
          %s242 = scalar_select %p241, %s18, 1
          %s243 = smul.addr %s242, 4
          %s244 = smul.addr %s243, 8
          %s245 = scalar_lea.vmem %s2, %s244
        $region28: #{cvae_forward.1} parent=19 // pred_fallthru
          _
        // Predicated region
        $region29: #{cvae_forward.1} parent=19 // pred_check
          %p246 = pneg %p111
        $region30: #{cvae_forward.1} parent=19 // pred_check_branch
          %248 = sbr.rel (%p246) target = $region32
        $region31: #{cvae_forward.1} parent=19 // pred_region
          %s249 = sand.u32 %s101, 1
          %s250 = scalar_lea.sflag [#allocation5], %s249
          %s251 = sand.u32 %s101, 1
          %s252 = smul.addr %s251, 512
          %s253 = scalar_lea.vmem [#allocation4], %s252
          %s255 = ssub.s32 8192, 8192
          %256 = vsyncadd %s250, %s255
          %s257 = smul.addr %s18, 128
          %s258 = smul.addr %s257, 64
          %s259 = scalar_lea.hbm %s3, %s258
          %s260 = sshll.u32 %s253, 4
          %s261 = int_to_ptr.vmem [resolvable:$true] %s260
          %266 = dma.hbm_to_vmem [thread:$0]  %s259, 8192, %s261, %s250, 256, 256, 16
        $region32: #{cvae_forward.1} parent=19 // pred_fallthru
          _
        // Predicated region
        $region33: #{cvae_forward.1} parent=19 // pred_check
          %p267 = pneg %p137
        $region34: #{cvae_forward.1} parent=19 // pred_check_branch
          %269 = sbr.rel (%p267) target = $region36
        $region35: #{cvae_forward.1} parent=19 // pred_region
          %p270 = scmp.lt.s32.totalorder %s18, 1
          %s271 = scalar_select %p270, %s18, 1
          %s272 = smul.addr %s271, 4
          %s273 = scalar_lea.vmem %s4, %s272
        $region36: #{cvae_forward.1} parent=19 // pred_fallthru
          _
        // Predicated region
        $region37: #{cvae_forward.1} parent=19 // pred_check
          %p274 = pneg %p163
        $region38: #{cvae_forward.1} parent=19 // pred_check_branch
          %276 = sbr.rel (%p274) target = $region40
        $region39: #{cvae_forward.1} parent=19 // pred_region
          %p277 = scmp.lt.s32.totalorder %s18, 1
          %s278 = scalar_select %p277, %s18, 1
          %s279 = smul.addr %s278, 4
          %s280 = smul.addr %s279, 8
          %s281 = scalar_lea.vmem %s5, %s280
        $region40: #{cvae_forward.1} parent=19 // pred_fallthru
          _
      $region20: #{cvae_forward.1} parent=5 // pred_fallthru
        _
      %p282 = scmp.le.s32.totalorder 1, %s18
      %p283 = scmp.lt.s32.totalorder %s18, 3
      %p284 = pnand %p282, %p283
      %p285 = pneg %p284
      // Predicated region
      $region41: #{cvae_forward.1} parent=5 // pred_check
        _
      $region42: #{cvae_forward.1} parent=5 // pred_check_branch
        %287 = sbr.rel (%p284) target = $region44
      $region43: #{cvae_forward.1} parent=5 // pred_region
        %s288 = ssub.s32 %s18, 1
        %s289 = sand.u32 %s52, 1
        %s290 = scalar_lea.sflag [#allocation3], %s289
        %s291 = sand.u32 %s52, 1
        %s292 = smul.addr %s291, 1024
        %s293 = scalar_lea.vmem [#allocation2], %s292
        // Predicated region
        $region45: #{cvae_forward.1} parent=43 // pred_check
          %p294 = pneg %p65
        $region46: #{cvae_forward.1} parent=43 // pred_check_branch
          %296 = sbr.rel (%p294) target = $region48
        $region47: #{cvae_forward.1} parent=43 // pred_region
          %297 = dma.done %s290, 16384
        $region48: #{cvae_forward.1} parent=43 // pred_fallthru
          _
        %s298 = sand.u32 %s104, 1
        %s299 = scalar_lea.sflag [#allocation5], %s298
        %s300 = sand.u32 %s104, 1
        %s301 = smul.addr %s300, 512
        %s302 = scalar_lea.vmem [#allocation4], %s301
        // Predicated region
        $region49: #{cvae_forward.1} parent=43 // pred_check
          %p303 = pneg %p117
        $region50: #{cvae_forward.1} parent=43 // pred_check_branch
          %305 = sbr.rel (%p303) target = $region52
        $region51: #{cvae_forward.1} parent=43 // pred_region
          %306 = dma.done %s299, 8192
        $region52: #{cvae_forward.1} parent=43 // pred_fallthru
          _
        %p307 = pneg %p39
        %p308 = pneg %p36
        %s309 = sand.u32 %s52, 1
        %s310 = scalar_lea.sflag [#allocation3], %s309
        %s311 = sand.u32 %s52, 1
        %s312 = smul.addr %s311, 1024
        %s313 = scalar_lea.vmem [#allocation2], %s312
        %p314 = pneg %p65
        %p315 = pneg %p62
        %p316 = scmp.lt.s32.totalorder %s23, 1
        %s317 = scalar_select %p316, %s23, 1
        %s318 = smul.addr %s317, 4
        %s319 = smul.addr %s318, 8
        %s320 = scalar_lea.vmem %s2, %s319
        %p321 = pneg %p91
        %p322 = pneg %p88
        %s323 = sand.u32 %s104, 1
        %s324 = scalar_lea.sflag [#allocation5], %s323
        %s325 = sand.u32 %s104, 1
        %s326 = smul.addr %s325, 512
        %s327 = scalar_lea.vmem [#allocation4], %s326
        %p328 = pneg %p117
        %p329 = pneg %p114
        %p330 = scmp.lt.s32.totalorder %s23, 1
        %s331 = scalar_select %p330, %s23, 1
        %s332 = smul.addr %s331, 4
        %s333 = scalar_lea.vmem %s4, %s332
        %p334 = pneg %p143
        %p335 = pneg %p140
        %p336 = scmp.lt.s32.totalorder %s23, 1
        %s337 = scalar_select %p336, %s23, 1
        %s338 = smul.addr %s337, 4
        %s339 = smul.addr %s338, 8
        %s340 = scalar_lea.vmem %s5, %s339
        %p341 = pneg %p169
        %p342 = pneg %p166
        %p343 = pneg %p195
        %p344 = pneg %p192
        %p345 = scmp.lt.s32.totalorder %s23, 1
        %s346 = scalar_select %p345, %s23, 1
        %s347 = smul.addr %s346, 12
        %s348 = smul.addr %s347, 8
        %s349 = scalar_lea.vmem %s6, %s348
        %p350 = scmp.lt.s32.totalorder %s23, 1
        %s351 = scalar_select %p350, %s23, 1
        %s352 = smul.addr %s351, 4
        %s353 = smul.addr %s352, 8
        %s354 = scalar_lea.vmem %s2, %s353
        %p355 = scmp.lt.s32.totalorder %s23, 1
        %s356 = scalar_select %p355, %s23, 1
        %s357 = smul.addr %s356, 4
        %s358 = scalar_lea.vmem %s4, %s357
        %p359 = scmp.lt.s32.totalorder %s23, 1
        %s360 = scalar_select %p359, %s23, 1
        %s361 = smul.addr %s360, 4
        %s362 = smul.addr %s361, 8
        %s363 = scalar_lea.vmem %s5, %s362
        %p364 = scmp.lt.s32.totalorder %s23, 1
        %s365 = scalar_select %p364, %s23, 1
        %s366 = smul.addr %s365, 12
        %s367 = smul.addr %s366, 8
        %s368 = scalar_lea.vmem %s6, %s367
        %v369 = vld [vmem:[%s0] sm:$0xff]
        %v370 = vld [vmem:[%s0 + $0x8] sm:$0xff]
        %v371 = vld [vmem:[%s0 + $0x10] sm:$0xff]
        %v372 = vld [vmem:[%s0 + $0x18] sm:$0xff]
        %v373 = vld [vmem:[%s0 + $0x20] sm:$0xff]
        %v374 = vld [vmem:[%s0 + $0x28] sm:$0xff]
        %v375 = vld [vmem:[%s0 + $0x30] sm:$0xff]
        %v376 = vld [vmem:[%s0 + $0x38] sm:$0xff]
        %v377 = vld [vmem:[%s293] sm:$0xff]
        %v378 = vld [vmem:[%s293 + $0x8] sm:$0xff]
        %v379 = vld [vmem:[%s293 + $0x10] sm:$0xff]
        %v380 = vld [vmem:[%s293 + $0x18] sm:$0xff]
        %v381 = vld [vmem:[%s293 + $0x20] sm:$0xff]
        %v382 = vld [vmem:[%s293 + $0x28] sm:$0xff]
        %v383 = vld [vmem:[%s293 + $0x30] sm:$0xff]
        %v384 = vld [vmem:[%s293 + $0x38] sm:$0xff]
        %v385 = vld [vmem:[%s293 + $0x40] sm:$0xff]
        %v386 = vld [vmem:[%s293 + $0x48] sm:$0xff]
        %v387 = vld [vmem:[%s293 + $0x50] sm:$0xff]
        %v388 = vld [vmem:[%s293 + $0x58] sm:$0xff]
        %v389 = vld [vmem:[%s293 + $0x60] sm:$0xff]
        %v390 = vld [vmem:[%s293 + $0x68] sm:$0xff]
        %v391 = vld [vmem:[%s293 + $0x70] sm:$0xff]
        %v392 = vld [vmem:[%s293 + $0x78] sm:$0xff]
        %v393 = vld [vmem:[%s293 + $0x80] sm:$0xff]
        %v394 = vld [vmem:[%s293 + $0x88] sm:$0xff]
        %v395 = vld [vmem:[%s293 + $0x90] sm:$0xff]
        %v396 = vld [vmem:[%s293 + $0x98] sm:$0xff]
        %v397 = vld [vmem:[%s293 + $0xa0] sm:$0xff]
        %v398 = vld [vmem:[%s293 + $0xa8] sm:$0xff]
        %v399 = vld [vmem:[%s293 + $0xb0] sm:$0xff]
        %v400 = vld [vmem:[%s293 + $0xb8] sm:$0xff]
        %v401 = vld [vmem:[%s293 + $0xc0] sm:$0xff]
        %v402 = vld [vmem:[%s293 + $0xc8] sm:$0xff]
        %v403 = vld [vmem:[%s293 + $0xd0] sm:$0xff]
        %v404 = vld [vmem:[%s293 + $0xd8] sm:$0xff]
        %v405 = vld [vmem:[%s293 + $0xe0] sm:$0xff]
        %v406 = vld [vmem:[%s293 + $0xe8] sm:$0xff]
        %v407 = vld [vmem:[%s293 + $0xf0] sm:$0xff]
        %v408 = vld [vmem:[%s293 + $0xf8] sm:$0xff]
        %v409 = vld [vmem:[%s293 + $0x100] sm:$0xff]
        %v410 = vld [vmem:[%s293 + $0x108] sm:$0xff]
        %v411 = vld [vmem:[%s293 + $0x110] sm:$0xff]
        %v412 = vld [vmem:[%s293 + $0x118] sm:$0xff]
        %v413 = vld [vmem:[%s293 + $0x120] sm:$0xff]
        %v414 = vld [vmem:[%s293 + $0x128] sm:$0xff]
        %v415 = vld [vmem:[%s293 + $0x130] sm:$0xff]
        %v416 = vld [vmem:[%s293 + $0x138] sm:$0xff]
        %v417 = vld [vmem:[%s293 + $0x140] sm:$0xff]
        %v418 = vld [vmem:[%s293 + $0x148] sm:$0xff]
        %v419 = vld [vmem:[%s293 + $0x150] sm:$0xff]
        %v420 = vld [vmem:[%s293 + $0x158] sm:$0xff]
        %v421 = vld [vmem:[%s293 + $0x160] sm:$0xff]
        %v422 = vld [vmem:[%s293 + $0x168] sm:$0xff]
        %v423 = vld [vmem:[%s293 + $0x170] sm:$0xff]
        %v424 = vld [vmem:[%s293 + $0x178] sm:$0xff]
        %v425 = vld [vmem:[%s293 + $0x180] sm:$0xff]
        %v426 = vld [vmem:[%s293 + $0x188] sm:$0xff]
        %v427 = vld [vmem:[%s293 + $0x190] sm:$0xff]
        %v428 = vld [vmem:[%s293 + $0x198] sm:$0xff]
        %v429 = vld [vmem:[%s293 + $0x1a0] sm:$0xff]
        %v430 = vld [vmem:[%s293 + $0x1a8] sm:$0xff]
        %v431 = vld [vmem:[%s293 + $0x1b0] sm:$0xff]
        %v432 = vld [vmem:[%s293 + $0x1b8] sm:$0xff]
        %v433 = vld [vmem:[%s293 + $0x1c0] sm:$0xff]
        %v434 = vld [vmem:[%s293 + $0x1c8] sm:$0xff]
        %v435 = vld [vmem:[%s293 + $0x1d0] sm:$0xff]
        %v436 = vld [vmem:[%s293 + $0x1d8] sm:$0xff]
        %v437 = vld [vmem:[%s293 + $0x1e0] sm:$0xff]
        %v438 = vld [vmem:[%s293 + $0x1e8] sm:$0xff]
        %v439 = vld [vmem:[%s293 + $0x1f0] sm:$0xff]
        %v440 = vld [vmem:[%s293 + $0x1f8] sm:$0xff]
        %v441 = vld [vmem:[%s293 + $0x200] sm:$0xff]
        %v442 = vld [vmem:[%s293 + $0x208] sm:$0xff]
        %v443 = vld [vmem:[%s293 + $0x210] sm:$0xff]
        %v444 = vld [vmem:[%s293 + $0x218] sm:$0xff]
        %v445 = vld [vmem:[%s293 + $0x220] sm:$0xff]
        %v446 = vld [vmem:[%s293 + $0x228] sm:$0xff]
        %v447 = vld [vmem:[%s293 + $0x230] sm:$0xff]
        %v448 = vld [vmem:[%s293 + $0x238] sm:$0xff]
        %v449 = vld [vmem:[%s293 + $0x240] sm:$0xff]
        %v450 = vld [vmem:[%s293 + $0x248] sm:$0xff]
        %v451 = vld [vmem:[%s293 + $0x250] sm:$0xff]
        %v452 = vld [vmem:[%s293 + $0x258] sm:$0xff]
        %v453 = vld [vmem:[%s293 + $0x260] sm:$0xff]
        %v454 = vld [vmem:[%s293 + $0x268] sm:$0xff]
        %v455 = vld [vmem:[%s293 + $0x270] sm:$0xff]
        %v456 = vld [vmem:[%s293 + $0x278] sm:$0xff]
        %v457 = vld [vmem:[%s293 + $0x280] sm:$0xff]
        %v458 = vld [vmem:[%s293 + $0x288] sm:$0xff]
        %v459 = vld [vmem:[%s293 + $0x290] sm:$0xff]
        %v460 = vld [vmem:[%s293 + $0x298] sm:$0xff]
        %v461 = vld [vmem:[%s293 + $0x2a0] sm:$0xff]
        %v462 = vld [vmem:[%s293 + $0x2a8] sm:$0xff]
        %v463 = vld [vmem:[%s293 + $0x2b0] sm:$0xff]
        %v464 = vld [vmem:[%s293 + $0x2b8] sm:$0xff]
        %v465 = vld [vmem:[%s293 + $0x2c0] sm:$0xff]
        %v466 = vld [vmem:[%s293 + $0x2c8] sm:$0xff]
        %v467 = vld [vmem:[%s293 + $0x2d0] sm:$0xff]
        %v468 = vld [vmem:[%s293 + $0x2d8] sm:$0xff]
        %v469 = vld [vmem:[%s293 + $0x2e0] sm:$0xff]
        %v470 = vld [vmem:[%s293 + $0x2e8] sm:$0xff]
        %v471 = vld [vmem:[%s293 + $0x2f0] sm:$0xff]
        %v472 = vld [vmem:[%s293 + $0x2f8] sm:$0xff]
        %v473 = vld [vmem:[%s293 + $0x300] sm:$0xff]
        %v474 = vld [vmem:[%s293 + $0x308] sm:$0xff]
        %v475 = vld [vmem:[%s293 + $0x310] sm:$0xff]
        %v476 = vld [vmem:[%s293 + $0x318] sm:$0xff]
        %v477 = vld [vmem:[%s293 + $0x320] sm:$0xff]
        %v478 = vld [vmem:[%s293 + $0x328] sm:$0xff]
        %v479 = vld [vmem:[%s293 + $0x330] sm:$0xff]
        %v480 = vld [vmem:[%s293 + $0x338] sm:$0xff]
        %v481 = vld [vmem:[%s293 + $0x340] sm:$0xff]
        %v482 = vld [vmem:[%s293 + $0x348] sm:$0xff]
        %v483 = vld [vmem:[%s293 + $0x350] sm:$0xff]
        %v484 = vld [vmem:[%s293 + $0x358] sm:$0xff]
        %v485 = vld [vmem:[%s293 + $0x360] sm:$0xff]
        %v486 = vld [vmem:[%s293 + $0x368] sm:$0xff]
        %v487 = vld [vmem:[%s293 + $0x370] sm:$0xff]
        %v488 = vld [vmem:[%s293 + $0x378] sm:$0xff]
        %v489 = vld [vmem:[%s293 + $0x380] sm:$0xff]
        %v490 = vld [vmem:[%s293 + $0x388] sm:$0xff]
        %v491 = vld [vmem:[%s293 + $0x390] sm:$0xff]
        %v492 = vld [vmem:[%s293 + $0x398] sm:$0xff]
        %v493 = vld [vmem:[%s293 + $0x3a0] sm:$0xff]
        %v494 = vld [vmem:[%s293 + $0x3a8] sm:$0xff]
        %v495 = vld [vmem:[%s293 + $0x3b0] sm:$0xff]
        %v496 = vld [vmem:[%s293 + $0x3b8] sm:$0xff]
        %v497 = vld [vmem:[%s293 + $0x3c0] sm:$0xff]
        %v498 = vld [vmem:[%s293 + $0x3c8] sm:$0xff]
        %v499 = vld [vmem:[%s293 + $0x3d0] sm:$0xff]
        %v500 = vld [vmem:[%s293 + $0x3d8] sm:$0xff]
        %v501 = vld [vmem:[%s293 + $0x3e0] sm:$0xff]
        %v502 = vld [vmem:[%s293 + $0x3e8] sm:$0xff]
        %v503 = vld [vmem:[%s293 + $0x3f0] sm:$0xff]
        %v504 = vld [vmem:[%s293 + $0x3f8] sm:$0xff]
        %v505 = vld [vmem:[%s354] sm:$0xff]
        %v506 = vld [vmem:[%s354 + $0x8] sm:$0xff]
        %v507 = vld [vmem:[%s354 + $0x10] sm:$0xff]
        %v508 = vld [vmem:[%s354 + $0x18] sm:$0xff]
        %v509 = vld [vmem:[%s302] sm:$0xff]
        %v510 = vld [vmem:[%s302 + $0x8] sm:$0xff]
        %v511 = vld [vmem:[%s302 + $0x10] sm:$0xff]
        %v512 = vld [vmem:[%s302 + $0x18] sm:$0xff]
        %v513 = vld [vmem:[%s302 + $0x20] sm:$0xff]
        %v514 = vld [vmem:[%s302 + $0x28] sm:$0xff]
        %v515 = vld [vmem:[%s302 + $0x30] sm:$0xff]
        %v516 = vld [vmem:[%s302 + $0x38] sm:$0xff]
        %v517 = vld [vmem:[%s302 + $0x40] sm:$0xff]
        %v518 = vld [vmem:[%s302 + $0x48] sm:$0xff]
        %v519 = vld [vmem:[%s302 + $0x50] sm:$0xff]
        %v520 = vld [vmem:[%s302 + $0x58] sm:$0xff]
        %v521 = vld [vmem:[%s302 + $0x60] sm:$0xff]
        %v522 = vld [vmem:[%s302 + $0x68] sm:$0xff]
        %v523 = vld [vmem:[%s302 + $0x70] sm:$0xff]
        %v524 = vld [vmem:[%s302 + $0x78] sm:$0xff]
        %v525 = vld [vmem:[%s302 + $0x80] sm:$0xff]
        %v526 = vld [vmem:[%s302 + $0x88] sm:$0xff]
        %v527 = vld [vmem:[%s302 + $0x90] sm:$0xff]
        %v528 = vld [vmem:[%s302 + $0x98] sm:$0xff]
        %v529 = vld [vmem:[%s302 + $0xa0] sm:$0xff]
        %v530 = vld [vmem:[%s302 + $0xa8] sm:$0xff]
        %v531 = vld [vmem:[%s302 + $0xb0] sm:$0xff]
        %v532 = vld [vmem:[%s302 + $0xb8] sm:$0xff]
        %v533 = vld [vmem:[%s302 + $0xc0] sm:$0xff]
        %v534 = vld [vmem:[%s302 + $0xc8] sm:$0xff]
        %v535 = vld [vmem:[%s302 + $0xd0] sm:$0xff]
        %v536 = vld [vmem:[%s302 + $0xd8] sm:$0xff]
        %v537 = vld [vmem:[%s302 + $0xe0] sm:$0xff]
        %v538 = vld [vmem:[%s302 + $0xe8] sm:$0xff]
        %v539 = vld [vmem:[%s302 + $0xf0] sm:$0xff]
        %v540 = vld [vmem:[%s302 + $0xf8] sm:$0xff]
        %v541 = vld [vmem:[%s302 + $0x100] sm:$0xff]
        %v542 = vld [vmem:[%s302 + $0x108] sm:$0xff]
        %v543 = vld [vmem:[%s302 + $0x110] sm:$0xff]
        %v544 = vld [vmem:[%s302 + $0x118] sm:$0xff]
        %v545 = vld [vmem:[%s302 + $0x120] sm:$0xff]
        %v546 = vld [vmem:[%s302 + $0x128] sm:$0xff]
        %v547 = vld [vmem:[%s302 + $0x130] sm:$0xff]
        %v548 = vld [vmem:[%s302 + $0x138] sm:$0xff]
        %v549 = vld [vmem:[%s302 + $0x140] sm:$0xff]
        %v550 = vld [vmem:[%s302 + $0x148] sm:$0xff]
        %v551 = vld [vmem:[%s302 + $0x150] sm:$0xff]
        %v552 = vld [vmem:[%s302 + $0x158] sm:$0xff]
        %v553 = vld [vmem:[%s302 + $0x160] sm:$0xff]
        %v554 = vld [vmem:[%s302 + $0x168] sm:$0xff]
        %v555 = vld [vmem:[%s302 + $0x170] sm:$0xff]
        %v556 = vld [vmem:[%s302 + $0x178] sm:$0xff]
        %v557 = vld [vmem:[%s302 + $0x180] sm:$0xff]
        %v558 = vld [vmem:[%s302 + $0x188] sm:$0xff]
        %v559 = vld [vmem:[%s302 + $0x190] sm:$0xff]
        %v560 = vld [vmem:[%s302 + $0x198] sm:$0xff]
        %v561 = vld [vmem:[%s302 + $0x1a0] sm:$0xff]
        %v562 = vld [vmem:[%s302 + $0x1a8] sm:$0xff]
        %v563 = vld [vmem:[%s302 + $0x1b0] sm:$0xff]
        %v564 = vld [vmem:[%s302 + $0x1b8] sm:$0xff]
        %v565 = vld [vmem:[%s302 + $0x1c0] sm:$0xff]
        %v566 = vld [vmem:[%s302 + $0x1c8] sm:$0xff]
        %v567 = vld [vmem:[%s302 + $0x1d0] sm:$0xff]
        %v568 = vld [vmem:[%s302 + $0x1d8] sm:$0xff]
        %v569 = vld [vmem:[%s302 + $0x1e0] sm:$0xff]
        %v570 = vld [vmem:[%s302 + $0x1e8] sm:$0xff]
        %v571 = vld [vmem:[%s302 + $0x1f0] sm:$0xff]
        %v572 = vld [vmem:[%s302 + $0x1f8] sm:$0xff]
        %v573 = vld [vmem:[%s358] sm:$0xf]
        %v574 = vld [vmem:[%s363] sm:$0xff]
        %v575 = vld [vmem:[%s363 + $0x8] sm:$0xff]
        %v576 = vld [vmem:[%s363 + $0x10] sm:$0xff]
        %v577 = vld [vmem:[%s363 + $0x18] sm:$0xff]
        %v586 = vunpack.c.l.b16 %v369
        %v587 = vunpack.c.h.b16 %v369
        %v588 = vunpack.c.l.b16 %v370
        %v589 = vunpack.c.h.b16 %v370
        %v590 = vunpack.c.l.b16 %v371
        %v591 = vunpack.c.h.b16 %v371
        %v592 = vunpack.c.l.b16 %v372
        %v593 = vunpack.c.h.b16 %v372
        %v594 = vunpack.c.l.b16 %v373
        %v595 = vunpack.c.h.b16 %v373
        %v596 = vunpack.c.l.b16 %v374
        %v597 = vunpack.c.h.b16 %v374
        %v598 = vunpack.c.l.b16 %v375
        %v599 = vunpack.c.h.b16 %v375
        %v600 = vunpack.c.l.b16 %v376
        %v601 = vunpack.c.h.b16 %v376
        %v602 = vpack.c.b16 %v594, %v586
        %v603 = vpack.c.b16 %v595, %v587
        %v604 = vpack.c.b16 %v596, %v588
        %v605 = vpack.c.b16 %v597, %v589
        %v606 = vpack.c.b16 %v598, %v590
        %v607 = vpack.c.b16 %v599, %v591
        %v608 = vpack.c.b16 %v600, %v592
        %v609 = vpack.c.b16 %v601, %v593
        %v746 = vunpack.c.l.b16 %v377
        %v747 = vunpack.c.h.b16 %v377
        %v748 = vunpack.c.l.b16 %v378
        %v749 = vunpack.c.h.b16 %v378
        %v750 = vunpack.c.l.b16 %v379
        %v751 = vunpack.c.h.b16 %v379
        %v752 = vunpack.c.l.b16 %v380
        %v753 = vunpack.c.h.b16 %v380
        %v754 = vunpack.c.l.b16 %v381
        %v755 = vunpack.c.h.b16 %v381
        %v756 = vunpack.c.l.b16 %v382
        %v757 = vunpack.c.h.b16 %v382
        %v758 = vunpack.c.l.b16 %v383
        %v759 = vunpack.c.h.b16 %v383
        %v760 = vunpack.c.l.b16 %v384
        %v761 = vunpack.c.h.b16 %v384
        %v762 = vunpack.c.l.b16 %v385
        %v763 = vunpack.c.h.b16 %v385
        %v764 = vunpack.c.l.b16 %v386
        %v765 = vunpack.c.h.b16 %v386
        %v766 = vunpack.c.l.b16 %v387
        %v767 = vunpack.c.h.b16 %v387
        %v768 = vunpack.c.l.b16 %v388
        %v769 = vunpack.c.h.b16 %v388
        %v770 = vunpack.c.l.b16 %v389
        %v771 = vunpack.c.h.b16 %v389
        %v772 = vunpack.c.l.b16 %v390
        %v773 = vunpack.c.h.b16 %v390
        %v774 = vunpack.c.l.b16 %v391
        %v775 = vunpack.c.h.b16 %v391
        %v776 = vunpack.c.l.b16 %v392
        %v777 = vunpack.c.h.b16 %v392
        %v778 = vunpack.c.l.b16 %v393
        %v779 = vunpack.c.h.b16 %v393
        %v780 = vunpack.c.l.b16 %v394
        %v781 = vunpack.c.h.b16 %v394
        %v782 = vunpack.c.l.b16 %v395
        %v783 = vunpack.c.h.b16 %v395
        %v784 = vunpack.c.l.b16 %v396
        %v785 = vunpack.c.h.b16 %v396
        %v786 = vunpack.c.l.b16 %v397
        %v787 = vunpack.c.h.b16 %v397
        %v788 = vunpack.c.l.b16 %v398
        %v789 = vunpack.c.h.b16 %v398
        %v790 = vunpack.c.l.b16 %v399
        %v791 = vunpack.c.h.b16 %v399
        %v792 = vunpack.c.l.b16 %v400
        %v793 = vunpack.c.h.b16 %v400
        %v794 = vunpack.c.l.b16 %v401
        %v795 = vunpack.c.h.b16 %v401
        %v796 = vunpack.c.l.b16 %v402
        %v797 = vunpack.c.h.b16 %v402
        %v798 = vunpack.c.l.b16 %v403
        %v799 = vunpack.c.h.b16 %v403
        %v800 = vunpack.c.l.b16 %v404
        %v801 = vunpack.c.h.b16 %v404
        %v802 = vunpack.c.l.b16 %v405
        %v803 = vunpack.c.h.b16 %v405
        %v804 = vunpack.c.l.b16 %v406
        %v805 = vunpack.c.h.b16 %v406
        %v806 = vunpack.c.l.b16 %v407
        %v807 = vunpack.c.h.b16 %v407
        %v808 = vunpack.c.l.b16 %v408
        %v809 = vunpack.c.h.b16 %v408
        %v810 = vunpack.c.l.b16 %v409
        %v811 = vunpack.c.h.b16 %v409
        %v812 = vunpack.c.l.b16 %v410
        %v813 = vunpack.c.h.b16 %v410
        %v814 = vunpack.c.l.b16 %v411
        %v815 = vunpack.c.h.b16 %v411
        %v816 = vunpack.c.l.b16 %v412
        %v817 = vunpack.c.h.b16 %v412
        %v818 = vunpack.c.l.b16 %v413
        %v819 = vunpack.c.h.b16 %v413
        %v820 = vunpack.c.l.b16 %v414
        %v821 = vunpack.c.h.b16 %v414
        %v822 = vunpack.c.l.b16 %v415
        %v823 = vunpack.c.h.b16 %v415
        %v824 = vunpack.c.l.b16 %v416
        %v825 = vunpack.c.h.b16 %v416
        %v826 = vunpack.c.l.b16 %v417
        %v827 = vunpack.c.h.b16 %v417
        %v828 = vunpack.c.l.b16 %v418
        %v829 = vunpack.c.h.b16 %v418
        %v830 = vunpack.c.l.b16 %v419
        %v831 = vunpack.c.h.b16 %v419
        %v832 = vunpack.c.l.b16 %v420
        %v833 = vunpack.c.h.b16 %v420
        %v834 = vunpack.c.l.b16 %v421
        %v835 = vunpack.c.h.b16 %v421
        %v836 = vunpack.c.l.b16 %v422
        %v837 = vunpack.c.h.b16 %v422
        %v838 = vunpack.c.l.b16 %v423
        %v839 = vunpack.c.h.b16 %v423
        %v840 = vunpack.c.l.b16 %v424
        %v841 = vunpack.c.h.b16 %v424
        %v842 = vunpack.c.l.b16 %v425
        %v843 = vunpack.c.h.b16 %v425
        %v844 = vunpack.c.l.b16 %v426
        %v845 = vunpack.c.h.b16 %v426
        %v846 = vunpack.c.l.b16 %v427
        %v847 = vunpack.c.h.b16 %v427
        %v848 = vunpack.c.l.b16 %v428
        %v849 = vunpack.c.h.b16 %v428
        %v850 = vunpack.c.l.b16 %v429
        %v851 = vunpack.c.h.b16 %v429
        %v852 = vunpack.c.l.b16 %v430
        %v853 = vunpack.c.h.b16 %v430
        %v854 = vunpack.c.l.b16 %v431
        %v855 = vunpack.c.h.b16 %v431
        %v856 = vunpack.c.l.b16 %v432
        %v857 = vunpack.c.h.b16 %v432
        %v858 = vunpack.c.l.b16 %v433
        %v859 = vunpack.c.h.b16 %v433
        %v860 = vunpack.c.l.b16 %v434
        %v861 = vunpack.c.h.b16 %v434
        %v862 = vunpack.c.l.b16 %v435
        %v863 = vunpack.c.h.b16 %v435
        %v864 = vunpack.c.l.b16 %v436
        %v865 = vunpack.c.h.b16 %v436
        %v866 = vunpack.c.l.b16 %v437
        %v867 = vunpack.c.h.b16 %v437
        %v868 = vunpack.c.l.b16 %v438
        %v869 = vunpack.c.h.b16 %v438
        %v870 = vunpack.c.l.b16 %v439
        %v871 = vunpack.c.h.b16 %v439
        %v872 = vunpack.c.l.b16 %v440
        %v873 = vunpack.c.h.b16 %v440
        %v874 = vunpack.c.l.b16 %v441
        %v875 = vunpack.c.h.b16 %v441
        %v876 = vunpack.c.l.b16 %v442
        %v877 = vunpack.c.h.b16 %v442
        %v878 = vunpack.c.l.b16 %v443
        %v879 = vunpack.c.h.b16 %v443
        %v880 = vunpack.c.l.b16 %v444
        %v881 = vunpack.c.h.b16 %v444
        %v882 = vunpack.c.l.b16 %v445
        %v883 = vunpack.c.h.b16 %v445
        %v884 = vunpack.c.l.b16 %v446
        %v885 = vunpack.c.h.b16 %v446
        %v886 = vunpack.c.l.b16 %v447
        %v887 = vunpack.c.h.b16 %v447
        %v888 = vunpack.c.l.b16 %v448
        %v889 = vunpack.c.h.b16 %v448
        %v890 = vunpack.c.l.b16 %v449
        %v891 = vunpack.c.h.b16 %v449
        %v892 = vunpack.c.l.b16 %v450
        %v893 = vunpack.c.h.b16 %v450
        %v894 = vunpack.c.l.b16 %v451
        %v895 = vunpack.c.h.b16 %v451
        %v896 = vunpack.c.l.b16 %v452
        %v897 = vunpack.c.h.b16 %v452
        %v898 = vunpack.c.l.b16 %v453
        %v899 = vunpack.c.h.b16 %v453
        %v900 = vunpack.c.l.b16 %v454
        %v901 = vunpack.c.h.b16 %v454
        %v902 = vunpack.c.l.b16 %v455
        %v903 = vunpack.c.h.b16 %v455
        %v904 = vunpack.c.l.b16 %v456
        %v905 = vunpack.c.h.b16 %v456
        %v906 = vunpack.c.l.b16 %v457
        %v907 = vunpack.c.h.b16 %v457
        %v908 = vunpack.c.l.b16 %v458
        %v909 = vunpack.c.h.b16 %v458
        %v910 = vunpack.c.l.b16 %v459
        %v911 = vunpack.c.h.b16 %v459
        %v912 = vunpack.c.l.b16 %v460
        %v913 = vunpack.c.h.b16 %v460
        %v914 = vunpack.c.l.b16 %v461
        %v915 = vunpack.c.h.b16 %v461
        %v916 = vunpack.c.l.b16 %v462
        %v917 = vunpack.c.h.b16 %v462
        %v918 = vunpack.c.l.b16 %v463
        %v919 = vunpack.c.h.b16 %v463
        %v920 = vunpack.c.l.b16 %v464
        %v921 = vunpack.c.h.b16 %v464
        %v922 = vunpack.c.l.b16 %v465
        %v923 = vunpack.c.h.b16 %v465
        %v924 = vunpack.c.l.b16 %v466
        %v925 = vunpack.c.h.b16 %v466
        %v926 = vunpack.c.l.b16 %v467
        %v927 = vunpack.c.h.b16 %v467
        %v928 = vunpack.c.l.b16 %v468
        %v929 = vunpack.c.h.b16 %v468
        %v930 = vunpack.c.l.b16 %v469
        %v931 = vunpack.c.h.b16 %v469
        %v932 = vunpack.c.l.b16 %v470
        %v933 = vunpack.c.h.b16 %v470
        %v934 = vunpack.c.l.b16 %v471
        %v935 = vunpack.c.h.b16 %v471
        %v936 = vunpack.c.l.b16 %v472
        %v937 = vunpack.c.h.b16 %v472
        %v938 = vunpack.c.l.b16 %v473
        %v939 = vunpack.c.h.b16 %v473
        %v940 = vunpack.c.l.b16 %v474
        %v941 = vunpack.c.h.b16 %v474
        %v942 = vunpack.c.l.b16 %v475
        %v943 = vunpack.c.h.b16 %v475
        %v944 = vunpack.c.l.b16 %v476
        %v945 = vunpack.c.h.b16 %v476
        %v946 = vunpack.c.l.b16 %v477
        %v947 = vunpack.c.h.b16 %v477
        %v948 = vunpack.c.l.b16 %v478
        %v949 = vunpack.c.h.b16 %v478
        %v950 = vunpack.c.l.b16 %v479
        %v951 = vunpack.c.h.b16 %v479
        %v952 = vunpack.c.l.b16 %v480
        %v953 = vunpack.c.h.b16 %v480
        %v954 = vunpack.c.l.b16 %v481
        %v955 = vunpack.c.h.b16 %v481
        %v956 = vunpack.c.l.b16 %v482
        %v957 = vunpack.c.h.b16 %v482
        %v958 = vunpack.c.l.b16 %v483
        %v959 = vunpack.c.h.b16 %v483
        %v960 = vunpack.c.l.b16 %v484
        %v961 = vunpack.c.h.b16 %v484
        %v962 = vunpack.c.l.b16 %v485
        %v963 = vunpack.c.h.b16 %v485
        %v964 = vunpack.c.l.b16 %v486
        %v965 = vunpack.c.h.b16 %v486
        %v966 = vunpack.c.l.b16 %v487
        %v967 = vunpack.c.h.b16 %v487
        %v968 = vunpack.c.l.b16 %v488
        %v969 = vunpack.c.h.b16 %v488
        %v970 = vunpack.c.l.b16 %v489
        %v971 = vunpack.c.h.b16 %v489
        %v972 = vunpack.c.l.b16 %v490
        %v973 = vunpack.c.h.b16 %v490
        %v974 = vunpack.c.l.b16 %v491
        %v975 = vunpack.c.h.b16 %v491
        %v976 = vunpack.c.l.b16 %v492
        %v977 = vunpack.c.h.b16 %v492
        %v978 = vunpack.c.l.b16 %v493
        %v979 = vunpack.c.h.b16 %v493
        %v980 = vunpack.c.l.b16 %v494
        %v981 = vunpack.c.h.b16 %v494
        %v982 = vunpack.c.l.b16 %v495
        %v983 = vunpack.c.h.b16 %v495
        %v984 = vunpack.c.l.b16 %v496
        %v985 = vunpack.c.h.b16 %v496
        %v986 = vunpack.c.l.b16 %v497
        %v987 = vunpack.c.h.b16 %v497
        %v988 = vunpack.c.l.b16 %v498
        %v989 = vunpack.c.h.b16 %v498
        %v990 = vunpack.c.l.b16 %v499
        %v991 = vunpack.c.h.b16 %v499
        %v992 = vunpack.c.l.b16 %v500
        %v993 = vunpack.c.h.b16 %v500
        %v994 = vunpack.c.l.b16 %v501
        %v995 = vunpack.c.h.b16 %v501
        %v996 = vunpack.c.l.b16 %v502
        %v997 = vunpack.c.h.b16 %v502
        %v998 = vunpack.c.l.b16 %v503
        %v999 = vunpack.c.h.b16 %v503
        %v1000 = vunpack.c.l.b16 %v504
        %v1001 = vunpack.c.h.b16 %v504
        %v1002 = vpack.c.b16 %v748, %v746
        %v1003 = vpack.c.b16 %v749, %v747
        %v1004 = vpack.c.b16 %v752, %v750
        %v1005 = vpack.c.b16 %v753, %v751
        %v1006 = vpack.c.b16 %v756, %v754
        %v1007 = vpack.c.b16 %v757, %v755
        %v1008 = vpack.c.b16 %v760, %v758
        %v1009 = vpack.c.b16 %v761, %v759
        %v1010 = vpack.c.b16 %v764, %v762
        %v1011 = vpack.c.b16 %v765, %v763
        %v1012 = vpack.c.b16 %v768, %v766
        %v1013 = vpack.c.b16 %v769, %v767
        %v1014 = vpack.c.b16 %v772, %v770
        %v1015 = vpack.c.b16 %v773, %v771
        %v1016 = vpack.c.b16 %v776, %v774
        %v1017 = vpack.c.b16 %v777, %v775
        %v1018 = vpack.c.b16 %v780, %v778
        %v1019 = vpack.c.b16 %v781, %v779
        %v1020 = vpack.c.b16 %v784, %v782
        %v1021 = vpack.c.b16 %v785, %v783
        %v1022 = vpack.c.b16 %v788, %v786
        %v1023 = vpack.c.b16 %v789, %v787
        %v1024 = vpack.c.b16 %v792, %v790
        %v1025 = vpack.c.b16 %v793, %v791
        %v1026 = vpack.c.b16 %v796, %v794
        %v1027 = vpack.c.b16 %v797, %v795
        %v1028 = vpack.c.b16 %v800, %v798
        %v1029 = vpack.c.b16 %v801, %v799
        %v1030 = vpack.c.b16 %v804, %v802
        %v1031 = vpack.c.b16 %v805, %v803
        %v1032 = vpack.c.b16 %v808, %v806
        %v1033 = vpack.c.b16 %v809, %v807
        %v1034 = vpack.c.b16 %v812, %v810
        %v1035 = vpack.c.b16 %v813, %v811
        %v1036 = vpack.c.b16 %v816, %v814
        %v1037 = vpack.c.b16 %v817, %v815
        %v1038 = vpack.c.b16 %v820, %v818
        %v1039 = vpack.c.b16 %v821, %v819
        %v1040 = vpack.c.b16 %v824, %v822
        %v1041 = vpack.c.b16 %v825, %v823
        %v1042 = vpack.c.b16 %v828, %v826
        %v1043 = vpack.c.b16 %v829, %v827
        %v1044 = vpack.c.b16 %v832, %v830
        %v1045 = vpack.c.b16 %v833, %v831
        %v1046 = vpack.c.b16 %v836, %v834
        %v1047 = vpack.c.b16 %v837, %v835
        %v1048 = vpack.c.b16 %v840, %v838
        %v1049 = vpack.c.b16 %v841, %v839
        %v1050 = vpack.c.b16 %v844, %v842
        %v1051 = vpack.c.b16 %v845, %v843
        %v1052 = vpack.c.b16 %v848, %v846
        %v1053 = vpack.c.b16 %v849, %v847
        %v1054 = vpack.c.b16 %v852, %v850
        %v1055 = vpack.c.b16 %v853, %v851
        %v1056 = vpack.c.b16 %v856, %v854
        %v1057 = vpack.c.b16 %v857, %v855
        %v1058 = vpack.c.b16 %v860, %v858
        %v1059 = vpack.c.b16 %v861, %v859
        %v1060 = vpack.c.b16 %v864, %v862
        %v1061 = vpack.c.b16 %v865, %v863
        %v1062 = vpack.c.b16 %v868, %v866
        %v1063 = vpack.c.b16 %v869, %v867
        %v1064 = vpack.c.b16 %v872, %v870
        %v1065 = vpack.c.b16 %v873, %v871
        %v1066 = vpack.c.b16 %v876, %v874
        %v1067 = vpack.c.b16 %v877, %v875
        %v1068 = vpack.c.b16 %v880, %v878
        %v1069 = vpack.c.b16 %v881, %v879
        %v1070 = vpack.c.b16 %v884, %v882
        %v1071 = vpack.c.b16 %v885, %v883
        %v1072 = vpack.c.b16 %v888, %v886
        %v1073 = vpack.c.b16 %v889, %v887
        %v1074 = vpack.c.b16 %v892, %v890
        %v1075 = vpack.c.b16 %v893, %v891
        %v1076 = vpack.c.b16 %v896, %v894
        %v1077 = vpack.c.b16 %v897, %v895
        %v1078 = vpack.c.b16 %v900, %v898
        %v1079 = vpack.c.b16 %v901, %v899
        %v1080 = vpack.c.b16 %v904, %v902
        %v1081 = vpack.c.b16 %v905, %v903
        %v1082 = vpack.c.b16 %v908, %v906
        %v1083 = vpack.c.b16 %v909, %v907
        %v1084 = vpack.c.b16 %v912, %v910
        %v1085 = vpack.c.b16 %v913, %v911
        %v1086 = vpack.c.b16 %v916, %v914
        %v1087 = vpack.c.b16 %v917, %v915
        %v1088 = vpack.c.b16 %v920, %v918
        %v1089 = vpack.c.b16 %v921, %v919
        %v1090 = vpack.c.b16 %v924, %v922
        %v1091 = vpack.c.b16 %v925, %v923
        %v1092 = vpack.c.b16 %v928, %v926
        %v1093 = vpack.c.b16 %v929, %v927
        %v1094 = vpack.c.b16 %v932, %v930
        %v1095 = vpack.c.b16 %v933, %v931
        %v1096 = vpack.c.b16 %v936, %v934
        %v1097 = vpack.c.b16 %v937, %v935
        %v1098 = vpack.c.b16 %v940, %v938
        %v1099 = vpack.c.b16 %v941, %v939
        %v1100 = vpack.c.b16 %v944, %v942
        %v1101 = vpack.c.b16 %v945, %v943
        %v1102 = vpack.c.b16 %v948, %v946
        %v1103 = vpack.c.b16 %v949, %v947
        %v1104 = vpack.c.b16 %v952, %v950
        %v1105 = vpack.c.b16 %v953, %v951
        %v1106 = vpack.c.b16 %v956, %v954
        %v1107 = vpack.c.b16 %v957, %v955
        %v1108 = vpack.c.b16 %v960, %v958
        %v1109 = vpack.c.b16 %v961, %v959
        %v1110 = vpack.c.b16 %v964, %v962
        %v1111 = vpack.c.b16 %v965, %v963
        %v1112 = vpack.c.b16 %v968, %v966
        %v1113 = vpack.c.b16 %v969, %v967
        %v1114 = vpack.c.b16 %v972, %v970
        %v1115 = vpack.c.b16 %v973, %v971
        %v1116 = vpack.c.b16 %v976, %v974
        %v1117 = vpack.c.b16 %v977, %v975
        %v1118 = vpack.c.b16 %v980, %v978
        %v1119 = vpack.c.b16 %v981, %v979
        %v1120 = vpack.c.b16 %v984, %v982
        %v1121 = vpack.c.b16 %v985, %v983
        %v1122 = vpack.c.b16 %v988, %v986
        %v1123 = vpack.c.b16 %v989, %v987
        %v1124 = vpack.c.b16 %v992, %v990
        %v1125 = vpack.c.b16 %v993, %v991
        %v1126 = vpack.c.b16 %v996, %v994
        %v1127 = vpack.c.b16 %v997, %v995
        %v1128 = vpack.c.b16 %v1000, %v998
        %v1129 = vpack.c.b16 %v1001, %v999
        %1258 = vmatprep.subr.bf16.mxu0 %v1003
        %1259 = vmatpush1.bf16.msra.mxu0 %v1002
        %1260 = vmatprep.subr.bf16.mxu0 %v1005
        %1261 = vmatpush1.bf16.msra.mxu0 %v1004
        %1262 = vmatprep.subr.bf16.mxu0 %v1007
        %1263 = vmatpush1.bf16.msra.mxu0 %v1006
        %1264 = vmatprep.subr.bf16.mxu0 %v1009
        %1265 = vmatpush1.bf16.msra.mxu0 %v1008
        %1266 = vmatprep.subr.bf16.mxu0 %v1011
        %1267 = vmatpush1.bf16.msra.mxu0 %v1010
        %1268 = vmatprep.subr.bf16.mxu0 %v1013
        %1269 = vmatpush1.bf16.msra.mxu0 %v1012
        %1270 = vmatprep.subr.bf16.mxu0 %v1015
        %1271 = vmatpush1.bf16.msra.mxu0 %v1014
        %1272 = vmatprep.subr.bf16.mxu0 %v1017
        %1273 = vmatpush1.bf16.msra.mxu0 %v1016
        %1274 = vmatprep.subr.bf16.mxu0 %v1019
        %1275 = vmatpush1.bf16.msra.mxu0 %v1018
        %1276 = vmatprep.subr.bf16.mxu0 %v1021
        %1277 = vmatpush1.bf16.msra.mxu0 %v1020
        %1278 = vmatprep.subr.bf16.mxu0 %v1023
        %1279 = vmatpush1.bf16.msra.mxu0 %v1022
        %1280 = vmatprep.subr.bf16.mxu0 %v1025
        %1281 = vmatpush1.bf16.msra.mxu0 %v1024
        %1282 = vmatprep.subr.bf16.mxu0 %v1027
        %1283 = vmatpush1.bf16.msra.mxu0 %v1026
        %1284 = vmatprep.subr.bf16.mxu0 %v1029
        %1285 = vmatpush1.bf16.msra.mxu0 %v1028
        %1286 = vmatprep.subr.bf16.mxu0 %v1031
        %1287 = vmatpush1.bf16.msra.mxu0 %v1030
        %1288 = vmatprep.subr.bf16.mxu0 %v1033
        %1289 = vmatpush1.bf16.msra.mxu0 %v1032
        %1290 = vmatprep.mubr.bf16.mxu0 %v603
        %1291 = vmatmul.mubr.bf16.gmra.mrb[0].mxu0 %v602
        %v1292 = vpop.f32.mrb[0].mxu0
        %v1293 = vadd.f32 %v505, %v1292
        %v1294 = vpop.f32.mrb[0].mxu0
        %v1295 = vadd.f32 %v506, %v1294
        %v1296 = vpop.f32.mrb[0].mxu0
        %v1297 = vadd.f32 %v507, %v1296
        %v1298 = vpop.f32.mrb[0].mxu0
        %v1299 = vadd.f32 %v508, %v1298
        %1300 = vdwg.mxu0
        %1301 = vmatprep.subr.bf16.mxu0 %v1035
        %1302 = vmatpush1.bf16.msra.mxu0 %v1034
        %1303 = vmatprep.subr.bf16.mxu0 %v1037
        %1304 = vmatpush1.bf16.msra.mxu0 %v1036
        %1305 = vmatprep.subr.bf16.mxu0 %v1039
        %1306 = vmatpush1.bf16.msra.mxu0 %v1038
        %1307 = vmatprep.subr.bf16.mxu0 %v1041
        %1308 = vmatpush1.bf16.msra.mxu0 %v1040
        %1309 = vmatprep.subr.bf16.mxu0 %v1043
        %1310 = vmatpush1.bf16.msra.mxu0 %v1042
        %1311 = vmatprep.subr.bf16.mxu0 %v1045
        %1312 = vmatpush1.bf16.msra.mxu0 %v1044
        %1313 = vmatprep.subr.bf16.mxu0 %v1047
        %1314 = vmatpush1.bf16.msra.mxu0 %v1046
        %1315 = vmatprep.subr.bf16.mxu0 %v1049
        %1316 = vmatpush1.bf16.msra.mxu0 %v1048
        %1317 = vmatprep.subr.bf16.mxu0 %v1051
        %1318 = vmatpush1.bf16.msra.mxu0 %v1050
        %1319 = vmatprep.subr.bf16.mxu0 %v1053
        %1320 = vmatpush1.bf16.msra.mxu0 %v1052
        %1321 = vmatprep.subr.bf16.mxu0 %v1055
        %1322 = vmatpush1.bf16.msra.mxu0 %v1054
        %1323 = vmatprep.subr.bf16.mxu0 %v1057
        %1324 = vmatpush1.bf16.msra.mxu0 %v1056
        %1325 = vmatprep.subr.bf16.mxu0 %v1059
        %1326 = vmatpush1.bf16.msra.mxu0 %v1058
        %1327 = vmatprep.subr.bf16.mxu0 %v1061
        %1328 = vmatpush1.bf16.msra.mxu0 %v1060
        %1329 = vmatprep.subr.bf16.mxu0 %v1063
        %1330 = vmatpush1.bf16.msra.mxu0 %v1062
        %1331 = vmatprep.subr.bf16.mxu0 %v1065
        %1332 = vmatpush1.bf16.msra.mxu0 %v1064
        %1333 = vmatprep.mubr.bf16.mxu0 %v605
        %1334 = vmatmul.mubr.bf16.gmra.mrb[0].mxu0 %v604
        %v1335 = vpop.f32.mrb[0].mxu0
        %v1336 = vadd.f32 %v1293, %v1335
        %v1337 = vpop.f32.mrb[0].mxu0
        %v1338 = vadd.f32 %v1295, %v1337
        %v1339 = vpop.f32.mrb[0].mxu0
        %v1340 = vadd.f32 %v1297, %v1339
        %v1341 = vpop.f32.mrb[0].mxu0
        %v1342 = vadd.f32 %v1299, %v1341
        %1343 = vdwg.mxu0
        %1344 = vmatprep.subr.bf16.mxu0 %v1067
        %1345 = vmatpush1.bf16.msra.mxu0 %v1066
        %1346 = vmatprep.subr.bf16.mxu0 %v1069
        %1347 = vmatpush1.bf16.msra.mxu0 %v1068
        %1348 = vmatprep.subr.bf16.mxu0 %v1071
        %1349 = vmatpush1.bf16.msra.mxu0 %v1070
        %1350 = vmatprep.subr.bf16.mxu0 %v1073
        %1351 = vmatpush1.bf16.msra.mxu0 %v1072
        %1352 = vmatprep.subr.bf16.mxu0 %v1075
        %1353 = vmatpush1.bf16.msra.mxu0 %v1074
        %1354 = vmatprep.subr.bf16.mxu0 %v1077
        %1355 = vmatpush1.bf16.msra.mxu0 %v1076
        %1356 = vmatprep.subr.bf16.mxu0 %v1079
        %1357 = vmatpush1.bf16.msra.mxu0 %v1078
        %1358 = vmatprep.subr.bf16.mxu0 %v1081
        %1359 = vmatpush1.bf16.msra.mxu0 %v1080
        %1360 = vmatprep.subr.bf16.mxu0 %v1083
        %1361 = vmatpush1.bf16.msra.mxu0 %v1082
        %1362 = vmatprep.subr.bf16.mxu0 %v1085
        %1363 = vmatpush1.bf16.msra.mxu0 %v1084
        %1364 = vmatprep.subr.bf16.mxu0 %v1087
        %1365 = vmatpush1.bf16.msra.mxu0 %v1086
        %1366 = vmatprep.subr.bf16.mxu0 %v1089
        %1367 = vmatpush1.bf16.msra.mxu0 %v1088
        %1368 = vmatprep.subr.bf16.mxu0 %v1091
        %1369 = vmatpush1.bf16.msra.mxu0 %v1090
        %1370 = vmatprep.subr.bf16.mxu0 %v1093
        %1371 = vmatpush1.bf16.msra.mxu0 %v1092
        %1372 = vmatprep.subr.bf16.mxu0 %v1095
        %1373 = vmatpush1.bf16.msra.mxu0 %v1094
        %1374 = vmatprep.subr.bf16.mxu0 %v1097
        %1375 = vmatpush1.bf16.msra.mxu0 %v1096
        %1376 = vmatprep.mubr.bf16.mxu0 %v607
        %1377 = vmatmul.mubr.bf16.gmra.mrb[0].mxu0 %v606
        %v1378 = vpop.f32.mrb[0].mxu0
        %v1379 = vadd.f32 %v1336, %v1378
        %v1380 = vpop.f32.mrb[0].mxu0
        %v1381 = vadd.f32 %v1338, %v1380
        %v1382 = vpop.f32.mrb[0].mxu0
        %v1383 = vadd.f32 %v1340, %v1382
        %v1384 = vpop.f32.mrb[0].mxu0
        %v1385 = vadd.f32 %v1342, %v1384
        %1386 = vdwg.mxu0
        %1387 = vmatprep.subr.bf16.mxu0 %v1099
        %1388 = vmatpush1.bf16.msra.mxu0 %v1098
        %1389 = vmatprep.subr.bf16.mxu0 %v1101
        %1390 = vmatpush1.bf16.msra.mxu0 %v1100
        %1391 = vmatprep.subr.bf16.mxu0 %v1103
        %1392 = vmatpush1.bf16.msra.mxu0 %v1102
        %1393 = vmatprep.subr.bf16.mxu0 %v1105
        %1394 = vmatpush1.bf16.msra.mxu0 %v1104
        %1395 = vmatprep.subr.bf16.mxu0 %v1107
        %1396 = vmatpush1.bf16.msra.mxu0 %v1106
        %1397 = vmatprep.subr.bf16.mxu0 %v1109
        %1398 = vmatpush1.bf16.msra.mxu0 %v1108
        %1399 = vmatprep.subr.bf16.mxu0 %v1111
        %1400 = vmatpush1.bf16.msra.mxu0 %v1110
        %1401 = vmatprep.subr.bf16.mxu0 %v1113
        %1402 = vmatpush1.bf16.msra.mxu0 %v1112
        %1403 = vmatprep.subr.bf16.mxu0 %v1115
        %1404 = vmatpush1.bf16.msra.mxu0 %v1114
        %1405 = vmatprep.subr.bf16.mxu0 %v1117
        %1406 = vmatpush1.bf16.msra.mxu0 %v1116
        %1407 = vmatprep.subr.bf16.mxu0 %v1119
        %1408 = vmatpush1.bf16.msra.mxu0 %v1118
        %1409 = vmatprep.subr.bf16.mxu0 %v1121
        %1410 = vmatpush1.bf16.msra.mxu0 %v1120
        %1411 = vmatprep.subr.bf16.mxu0 %v1123
        %1412 = vmatpush1.bf16.msra.mxu0 %v1122
        %1413 = vmatprep.subr.bf16.mxu0 %v1125
        %1414 = vmatpush1.bf16.msra.mxu0 %v1124
        %1415 = vmatprep.subr.bf16.mxu0 %v1127
        %1416 = vmatpush1.bf16.msra.mxu0 %v1126
        %1417 = vmatprep.subr.bf16.mxu0 %v1129
        %1418 = vmatpush1.bf16.msra.mxu0 %v1128
        %1419 = vmatprep.mubr.bf16.mxu0 %v609
        %1420 = vmatmul.mubr.bf16.gmra.mrb[0].mxu0 %v608
        %v1421 = vpop.f32.mrb[0].mxu0
        %v1422 = vadd.f32 %v1379, %v1421
        %v1423 = vpop.f32.mrb[0].mxu0
        %v1424 = vadd.f32 %v1381, %v1423
        %v1425 = vpop.f32.mrb[0].mxu0
        %v1426 = vadd.f32 %v1383, %v1425
        %v1427 = vpop.f32.mrb[0].mxu0
        %v1428 = vadd.f32 %v1385, %v1427
        %1429 = vdwg.mxu0
        %v1430 = vtanh.pop %v1422
        %v1431 = vtanh.pop %v1424
        %v1432 = vtanh.pop %v1426
        %v1433 = vtanh.pop %v1428
        %v1434 = vpack.c.bf16 %v1432, %v1430
        %v1435 = vpack.c.bf16 %v1433, %v1431
        %v1437 = vlaneseq
        %v1438 = vshrl.u32 %v1437, 7
        %v1439 = vsub.s32 0, %v1438
        %v1440 = vrot.slane %v573, %v1439
        %v1441 = vlaneseq
        %v1442 = vshrl.u32 %v1441, 7
        %v1443 = vsub.s32 1, %v1442
        %v1444 = vrot.slane %v573, %v1443
        %v1445 = vlaneseq
        %v1446 = vshrl.u32 %v1445, 7
        %v1447 = vsub.s32 2, %v1446
        %v1448 = vrot.slane %v573, %v1447
        %v1449 = vlaneseq
        %v1450 = vshrl.u32 %v1449, 7
        %v1451 = vsub.s32 3, %v1450
        %v1452 = vrot.slane %v573, %v1451
        %v1521 = vunpack.c.l.b16 %v509
        %v1522 = vunpack.c.h.b16 %v509
        %v1523 = vunpack.c.l.b16 %v510
        %v1524 = vunpack.c.h.b16 %v510
        %v1525 = vunpack.c.l.b16 %v511
        %v1526 = vunpack.c.h.b16 %v511
        %v1527 = vunpack.c.l.b16 %v512
        %v1528 = vunpack.c.h.b16 %v512
        %v1529 = vunpack.c.l.b16 %v513
        %v1530 = vunpack.c.h.b16 %v513
        %v1531 = vunpack.c.l.b16 %v514
        %v1532 = vunpack.c.h.b16 %v514
        %v1533 = vunpack.c.l.b16 %v515
        %v1534 = vunpack.c.h.b16 %v515
        %v1535 = vunpack.c.l.b16 %v516
        %v1536 = vunpack.c.h.b16 %v516
        %v1537 = vunpack.c.l.b16 %v517
        %v1538 = vunpack.c.h.b16 %v517
        %v1539 = vunpack.c.l.b16 %v518
        %v1540 = vunpack.c.h.b16 %v518
        %v1541 = vunpack.c.l.b16 %v519
        %v1542 = vunpack.c.h.b16 %v519
        %v1543 = vunpack.c.l.b16 %v520
        %v1544 = vunpack.c.h.b16 %v520
        %v1545 = vunpack.c.l.b16 %v521
        %v1546 = vunpack.c.h.b16 %v521
        %v1547 = vunpack.c.l.b16 %v522
        %v1548 = vunpack.c.h.b16 %v522
        %v1549 = vunpack.c.l.b16 %v523
        %v1550 = vunpack.c.h.b16 %v523
        %v1551 = vunpack.c.l.b16 %v524
        %v1552 = vunpack.c.h.b16 %v524
        %v1553 = vunpack.c.l.b16 %v525
        %v1554 = vunpack.c.h.b16 %v525
        %v1555 = vunpack.c.l.b16 %v526
        %v1556 = vunpack.c.h.b16 %v526
        %v1557 = vunpack.c.l.b16 %v527
        %v1558 = vunpack.c.h.b16 %v527
        %v1559 = vunpack.c.l.b16 %v528
        %v1560 = vunpack.c.h.b16 %v528
        %v1561 = vunpack.c.l.b16 %v529
        %v1562 = vunpack.c.h.b16 %v529
        %v1563 = vunpack.c.l.b16 %v530
        %v1564 = vunpack.c.h.b16 %v530
        %v1565 = vunpack.c.l.b16 %v531
        %v1566 = vunpack.c.h.b16 %v531
        %v1567 = vunpack.c.l.b16 %v532
        %v1568 = vunpack.c.h.b16 %v532
        %v1569 = vunpack.c.l.b16 %v533
        %v1570 = vunpack.c.h.b16 %v533
        %v1571 = vunpack.c.l.b16 %v534
        %v1572 = vunpack.c.h.b16 %v534
        %v1573 = vunpack.c.l.b16 %v535
        %v1574 = vunpack.c.h.b16 %v535
        %v1575 = vunpack.c.l.b16 %v536
        %v1576 = vunpack.c.h.b16 %v536
        %v1577 = vunpack.c.l.b16 %v537
        %v1578 = vunpack.c.h.b16 %v537
        %v1579 = vunpack.c.l.b16 %v538
        %v1580 = vunpack.c.h.b16 %v538
        %v1581 = vunpack.c.l.b16 %v539
        %v1582 = vunpack.c.h.b16 %v539
        %v1583 = vunpack.c.l.b16 %v540
        %v1584 = vunpack.c.h.b16 %v540
        %v1585 = vunpack.c.l.b16 %v541
        %v1586 = vunpack.c.h.b16 %v541
        %v1587 = vunpack.c.l.b16 %v542
        %v1588 = vunpack.c.h.b16 %v542
        %v1589 = vunpack.c.l.b16 %v543
        %v1590 = vunpack.c.h.b16 %v543
        %v1591 = vunpack.c.l.b16 %v544
        %v1592 = vunpack.c.h.b16 %v544
        %v1593 = vunpack.c.l.b16 %v545
        %v1594 = vunpack.c.h.b16 %v545
        %v1595 = vunpack.c.l.b16 %v546
        %v1596 = vunpack.c.h.b16 %v546
        %v1597 = vunpack.c.l.b16 %v547
        %v1598 = vunpack.c.h.b16 %v547
        %v1599 = vunpack.c.l.b16 %v548
        %v1600 = vunpack.c.h.b16 %v548
        %v1601 = vunpack.c.l.b16 %v549
        %v1602 = vunpack.c.h.b16 %v549
        %v1603 = vunpack.c.l.b16 %v550
        %v1604 = vunpack.c.h.b16 %v550
        %v1605 = vunpack.c.l.b16 %v551
        %v1606 = vunpack.c.h.b16 %v551
        %v1607 = vunpack.c.l.b16 %v552
        %v1608 = vunpack.c.h.b16 %v552
        %v1609 = vunpack.c.l.b16 %v553
        %v1610 = vunpack.c.h.b16 %v553
        %v1611 = vunpack.c.l.b16 %v554
        %v1612 = vunpack.c.h.b16 %v554
        %v1613 = vunpack.c.l.b16 %v555
        %v1614 = vunpack.c.h.b16 %v555
        %v1615 = vunpack.c.l.b16 %v556
        %v1616 = vunpack.c.h.b16 %v556
        %v1617 = vunpack.c.l.b16 %v557
        %v1618 = vunpack.c.h.b16 %v557
        %v1619 = vunpack.c.l.b16 %v558
        %v1620 = vunpack.c.h.b16 %v558
        %v1621 = vunpack.c.l.b16 %v559
        %v1622 = vunpack.c.h.b16 %v559
        %v1623 = vunpack.c.l.b16 %v560
        %v1624 = vunpack.c.h.b16 %v560
        %v1625 = vunpack.c.l.b16 %v561
        %v1626 = vunpack.c.h.b16 %v561
        %v1627 = vunpack.c.l.b16 %v562
        %v1628 = vunpack.c.h.b16 %v562
        %v1629 = vunpack.c.l.b16 %v563
        %v1630 = vunpack.c.h.b16 %v563
        %v1631 = vunpack.c.l.b16 %v564
        %v1632 = vunpack.c.h.b16 %v564
        %v1633 = vunpack.c.l.b16 %v565
        %v1634 = vunpack.c.h.b16 %v565
        %v1635 = vunpack.c.l.b16 %v566
        %v1636 = vunpack.c.h.b16 %v566
        %v1637 = vunpack.c.l.b16 %v567
        %v1638 = vunpack.c.h.b16 %v567
        %v1639 = vunpack.c.l.b16 %v568
        %v1640 = vunpack.c.h.b16 %v568
        %v1641 = vunpack.c.l.b16 %v569
        %v1642 = vunpack.c.h.b16 %v569
        %v1643 = vunpack.c.l.b16 %v570
        %v1644 = vunpack.c.h.b16 %v570
        %v1645 = vunpack.c.l.b16 %v571
        %v1646 = vunpack.c.h.b16 %v571
        %v1647 = vunpack.c.l.b16 %v572
        %v1648 = vunpack.c.h.b16 %v572
        %v1649 = vpack.c.b16 %v1525, %v1521
        %v1650 = vpack.c.b16 %v1526, %v1522
        %v1651 = vpack.c.b16 %v1527, %v1523
        %v1652 = vpack.c.b16 %v1528, %v1524
        %v1653 = vpack.c.b16 %v1533, %v1529
        %v1654 = vpack.c.b16 %v1534, %v1530
        %v1655 = vpack.c.b16 %v1535, %v1531
        %v1656 = vpack.c.b16 %v1536, %v1532
        %v1657 = vpack.c.b16 %v1541, %v1537
        %v1658 = vpack.c.b16 %v1542, %v1538
        %v1659 = vpack.c.b16 %v1543, %v1539
        %v1660 = vpack.c.b16 %v1544, %v1540
        %v1661 = vpack.c.b16 %v1549, %v1545
        %v1662 = vpack.c.b16 %v1550, %v1546
        %v1663 = vpack.c.b16 %v1551, %v1547
        %v1664 = vpack.c.b16 %v1552, %v1548
        %v1665 = vpack.c.b16 %v1557, %v1553
        %v1666 = vpack.c.b16 %v1558, %v1554
        %v1667 = vpack.c.b16 %v1559, %v1555
        %v1668 = vpack.c.b16 %v1560, %v1556
        %v1669 = vpack.c.b16 %v1565, %v1561
        %v1670 = vpack.c.b16 %v1566, %v1562
        %v1671 = vpack.c.b16 %v1567, %v1563
        %v1672 = vpack.c.b16 %v1568, %v1564
        %v1673 = vpack.c.b16 %v1573, %v1569
        %v1674 = vpack.c.b16 %v1574, %v1570
        %v1675 = vpack.c.b16 %v1575, %v1571
        %v1676 = vpack.c.b16 %v1576, %v1572
        %v1677 = vpack.c.b16 %v1581, %v1577
        %v1678 = vpack.c.b16 %v1582, %v1578
        %v1679 = vpack.c.b16 %v1583, %v1579
        %v1680 = vpack.c.b16 %v1584, %v1580
        %v1681 = vpack.c.b16 %v1589, %v1585
        %v1682 = vpack.c.b16 %v1590, %v1586
        %v1683 = vpack.c.b16 %v1591, %v1587
        %v1684 = vpack.c.b16 %v1592, %v1588
        %v1685 = vpack.c.b16 %v1597, %v1593
        %v1686 = vpack.c.b16 %v1598, %v1594
        %v1687 = vpack.c.b16 %v1599, %v1595
        %v1688 = vpack.c.b16 %v1600, %v1596
        %v1689 = vpack.c.b16 %v1605, %v1601
        %v1690 = vpack.c.b16 %v1606, %v1602
        %v1691 = vpack.c.b16 %v1607, %v1603
        %v1692 = vpack.c.b16 %v1608, %v1604
        %v1693 = vpack.c.b16 %v1613, %v1609
        %v1694 = vpack.c.b16 %v1614, %v1610
        %v1695 = vpack.c.b16 %v1615, %v1611
        %v1696 = vpack.c.b16 %v1616, %v1612
        %v1697 = vpack.c.b16 %v1621, %v1617
        %v1698 = vpack.c.b16 %v1622, %v1618
        %v1699 = vpack.c.b16 %v1623, %v1619
        %v1700 = vpack.c.b16 %v1624, %v1620
        %v1701 = vpack.c.b16 %v1629, %v1625
        %v1702 = vpack.c.b16 %v1630, %v1626
        %v1703 = vpack.c.b16 %v1631, %v1627
        %v1704 = vpack.c.b16 %v1632, %v1628
        %v1705 = vpack.c.b16 %v1637, %v1633
        %v1706 = vpack.c.b16 %v1638, %v1634
        %v1707 = vpack.c.b16 %v1639, %v1635
        %v1708 = vpack.c.b16 %v1640, %v1636
        %v1709 = vpack.c.b16 %v1645, %v1641
        %v1710 = vpack.c.b16 %v1646, %v1642
        %v1711 = vpack.c.b16 %v1647, %v1643
        %v1712 = vpack.c.b16 %v1648, %v1644
        %1777 = vmatprep.subr.bf16.mxu0 %v1650
        %1778 = vmatpush1.bf16.msra.mxu0 %v1649
        %1779 = vmatprep.subr.bf16.mxu0 %v1654
        %1780 = vmatpush1.bf16.msra.mxu0 %v1653
        %1781 = vmatprep.subr.bf16.mxu0 %v1658
        %1782 = vmatpush1.bf16.msra.mxu0 %v1657
        %1783 = vmatprep.subr.bf16.mxu0 %v1662
        %1784 = vmatpush1.bf16.msra.mxu0 %v1661
        %1785 = vmatprep.subr.bf16.mxu0 %v1666
        %1786 = vmatpush1.bf16.msra.mxu0 %v1665
        %1787 = vmatprep.subr.bf16.mxu0 %v1670
        %1788 = vmatpush1.bf16.msra.mxu0 %v1669
        %1789 = vmatprep.subr.bf16.mxu0 %v1674
        %1790 = vmatpush1.bf16.msra.mxu0 %v1673
        %1791 = vmatprep.subr.bf16.mxu0 %v1678
        %1792 = vmatpush1.bf16.msra.mxu0 %v1677
        %1793 = vmatprep.subr.bf16.mxu0 %v1682
        %1794 = vmatpush1.bf16.msra.mxu0 %v1681
        %1795 = vmatprep.subr.bf16.mxu0 %v1686
        %1796 = vmatpush1.bf16.msra.mxu0 %v1685
        %1797 = vmatprep.subr.bf16.mxu0 %v1690
        %1798 = vmatpush1.bf16.msra.mxu0 %v1689
        %1799 = vmatprep.subr.bf16.mxu0 %v1694
        %1800 = vmatpush1.bf16.msra.mxu0 %v1693
        %1801 = vmatprep.subr.bf16.mxu0 %v1698
        %1802 = vmatpush1.bf16.msra.mxu0 %v1697
        %1803 = vmatprep.subr.bf16.mxu0 %v1702
        %1804 = vmatpush1.bf16.msra.mxu0 %v1701
        %1805 = vmatprep.subr.bf16.mxu0 %v1706
        %1806 = vmatpush1.bf16.msra.mxu0 %v1705
        %1807 = vmatprep.subr.bf16.mxu0 %v1710
        %1808 = vmatpush1.bf16.msra.mxu0 %v1709
        %1809 = vmatprep.mubr.bf16.mxu0 %v1435
        %1810 = vmatmul.mubr.bf16.gmra.mrb[0].mxu0 %v1434
        %v1811 = vpop.f32.mrb[0].mxu0
        %v1812 = vadd.f32 %v1440, %v1811
        %v1813 = vpop.f32.mrb[0].mxu0
        %v1814 = vadd.f32 %v1444, %v1813
        %v1815 = vpop.f32.mrb[0].mxu0
        %v1816 = vadd.f32 %v1440, %v1815
        %v1817 = vpop.f32.mrb[0].mxu0
        %v1818 = vadd.f32 %v1444, %v1817
        %1819 = vdwg.mxu0
        %1820 = vmatprep.subr.bf16.mxu0 %v1652
        %1821 = vmatpush1.bf16.msra.mxu0 %v1651
        %1822 = vmatprep.subr.bf16.mxu0 %v1656
        %1823 = vmatpush1.bf16.msra.mxu0 %v1655
        %1824 = vmatprep.subr.bf16.mxu0 %v1660
        %1825 = vmatpush1.bf16.msra.mxu0 %v1659
        %1826 = vmatprep.subr.bf16.mxu0 %v1664
        %1827 = vmatpush1.bf16.msra.mxu0 %v1663
        %1828 = vmatprep.subr.bf16.mxu0 %v1668
        %1829 = vmatpush1.bf16.msra.mxu0 %v1667
        %1830 = vmatprep.subr.bf16.mxu0 %v1672
        %1831 = vmatpush1.bf16.msra.mxu0 %v1671
        %1832 = vmatprep.subr.bf16.mxu0 %v1676
        %1833 = vmatpush1.bf16.msra.mxu0 %v1675
        %1834 = vmatprep.subr.bf16.mxu0 %v1680
        %1835 = vmatpush1.bf16.msra.mxu0 %v1679
        %1836 = vmatprep.subr.bf16.mxu0 %v1684
        %1837 = vmatpush1.bf16.msra.mxu0 %v1683
        %1838 = vmatprep.subr.bf16.mxu0 %v1688
        %1839 = vmatpush1.bf16.msra.mxu0 %v1687
        %1840 = vmatprep.subr.bf16.mxu0 %v1692
        %1841 = vmatpush1.bf16.msra.mxu0 %v1691
        %1842 = vmatprep.subr.bf16.mxu0 %v1696
        %1843 = vmatpush1.bf16.msra.mxu0 %v1695
        %1844 = vmatprep.subr.bf16.mxu0 %v1700
        %1845 = vmatpush1.bf16.msra.mxu0 %v1699
        %1846 = vmatprep.subr.bf16.mxu0 %v1704
        %1847 = vmatpush1.bf16.msra.mxu0 %v1703
        %1848 = vmatprep.subr.bf16.mxu0 %v1708
        %1849 = vmatpush1.bf16.msra.mxu0 %v1707
        %1850 = vmatprep.subr.bf16.mxu0 %v1712
        %1851 = vmatpush1.bf16.msra.mxu0 %v1711
        %1852 = vmatprep.mubr.bf16.mxu0 %v1435
        %1853 = vmatmul.mubr.bf16.gmra.mrb[0].mxu0 %v1434
        %v1854 = vpop.f32.mrb[0].mxu0
        %v1855 = vadd.f32 %v1448, %v1854
        %v1856 = vpop.f32.mrb[0].mxu0
        %v1857 = vadd.f32 %v1452, %v1856
        %v1858 = vpop.f32.mrb[0].mxu0
        %v1859 = vadd.f32 %v1448, %v1858
        %v1860 = vpop.f32.mrb[0].mxu0
        %v1861 = vadd.f32 %v1452, %v1860
        %1862 = vdwg.mxu0
        %v1863 = vmul.f32 %v1855, 0.5
        %v1864 = vmul.f32 %v1857, 0.5
        %v1865 = vmul.f32 %v1859, 0.5
        %v1866 = vmul.f32 %v1861, 0.5
        %v1867 = vmul.f32 %v1863, 1.442695
        %v1868 = vpow.pop %v1867
        %v1869 = vmul.f32 %v1864, 1.442695
        %v1870 = vpow.pop %v1869
        %v1871 = vmul.f32 %v1865, 1.442695
        %v1872 = vpow.pop %v1871
        %v1873 = vmul.f32 %v1866, 1.442695
        %v1874 = vpow.pop %v1873
        %v1875 = vmul.f32 %v1868, %v574
        %v1876 = vmul.f32 %v1870, %v575
        %v1877 = vmul.f32 %v1872, %v576
        %v1878 = vmul.f32 %v1874, %v577
        %v1879 = vadd.f32 %v1812, %v1875
        %v1880 = vadd.f32 %v1814, %v1876
        %v1881 = vadd.f32 %v1816, %v1877
        %v1882 = vadd.f32 %v1818, %v1878
        %1883 = vst [vmem:[%s368] sm:$0xff] %v1879
        %1884 = vst [vmem:[%s368 + $0x8] sm:$0xff] %v1880
        %1885 = vst [vmem:[%s368 + $0x10] sm:$0xff] %v1812
        %1886 = vst [vmem:[%s368 + $0x18] sm:$0xff] %v1814
        %1887 = vst [vmem:[%s368 + $0x20] sm:$0xff] %v1855
        %1888 = vst [vmem:[%s368 + $0x28] sm:$0xff] %v1857
        %1889 = vst [vmem:[%s368 + $0x30] sm:$0xff] %v1881
        %1890 = vst [vmem:[%s368 + $0x38] sm:$0xff] %v1882
        %1891 = vst [vmem:[%s368 + $0x40] sm:$0xff] %v1816
        %1892 = vst [vmem:[%s368 + $0x48] sm:$0xff] %v1818
        %1893 = vst [vmem:[%s368 + $0x50] sm:$0xff] %v1859
        %1894 = vst [vmem:[%s368 + $0x58] sm:$0xff] %v1861
        %p1895 = scmp.lt.s32.totalorder %s23, 1
        %s1896 = scalar_select %p1895, %s23, 1
        %s1897 = smul.addr %s1896, 12
        %s1898 = smul.addr %s1897, 8
        %s1899 = scalar_lea.vmem %s6, %s1898
        // Predicated region
        $region53: #{cvae_forward.1} parent=43 // pred_check
          %p1900 = pneg %p192
        $region54: #{cvae_forward.1} parent=43 // pred_check_branch
          %1902 = sbr.rel (%p1900) target = $region56
        $region55: #{cvae_forward.1} parent=43 // pred_region
          _
        $region56: #{cvae_forward.1} parent=43 // pred_fallthru
          _
      $region44: #{cvae_forward.1} parent=5 // pred_fallthru
        _
      %p1903 = scmp.le.s32.totalorder 2, %s18
      // Predicated region
      $region57: #{cvae_forward.1} parent=5 // pred_check
        %p1904 = pneg %p1903
      $region58: #{cvae_forward.1} parent=5 // pred_check_branch
        %1906 = sbr.rel (%p1904) target = $region60
      $region59: #{cvae_forward.1} parent=5 // pred_region
        %s1907 = ssub.s32 %s18, 2
        // Predicated region
        $region61: #{cvae_forward.1} parent=59 // pred_check
          %p1908 = pneg %p198
        $region62: #{cvae_forward.1} parent=59 // pred_check_branch
          %1910 = sbr.rel (%p1908) target = $region64
        $region63: #{cvae_forward.1} parent=59 // pred_region
          %p1911 = scmp.lt.s32.totalorder %s24, 1
          %s1912 = scalar_select %p1911, %s24, 1
          %s1913 = smul.addr %s1912, 12
          %s1914 = smul.addr %s1913, 8
          %s1915 = scalar_lea.vmem %s6, %s1914
        $region64: #{cvae_forward.1} parent=59 // pred_fallthru
          _
      $region60: #{cvae_forward.1} parent=5 // pred_fallthru
        _
    $region6: #{cvae_forward.1} parent=1 // loop_footer
      %s22 = sadd.s32 1, %s18
    $region7: #{cvae_forward.1} parent=1 // loop_footer_branch
      %17 = sbr.rel target = $region3
    $region8: #{cvae_forward.1} parent=1 // loop_exit
      _
    %1916 = vsyncpa [#allocation3], 1
    %s1917 = scalar_lea.sflag [#allocation3], 1
    %1918 = vsyncpa %s1917, 1
    %1919 = vsyncpa [#allocation5], 1
    %s1920 = scalar_lea.sflag [#allocation5], 1
    %1921 = vsyncpa %s1920, 1

</llo_original>
